<compile_context>
chip_gen: v5e
topology: v5e:2x2
jax: 0.10.0
libtpu: 0.0.40
codegen_flags: <defaults>
</compile_context>

<pallas_src>
import functools

import jax
import jax.numpy as jnp
from jax.experimental import pallas as pl
from jax.experimental.pallas import tpu as pltpu


def _block_kernel(x_ref, g1_ref, b1_ref,
                  wqkv_ref, bqkv_ref, wproj_ref, bproj_ref,
                  g2_ref, b2_ref,
                  wfc1_ref, bfc1_ref, wfc2_ref, bfc2_ref,
                  o_ref, *, dim, num_heads, eps, has_qkv_bias, gelu_approximate):
    head_dim = dim // num_heads
    mm = jnp.bfloat16                                # MXU operand dtype
    f32 = jnp.float32

    x = x_ref[0].astype(f32)                         # (N, C) residual carried in f32
    N = x.shape[0]

    # ---------------- LayerNorm 1 ----------------
    mean = jnp.mean(x, axis=-1, keepdims=True)
    var = jnp.mean(jnp.square(x - mean), axis=-1, keepdims=True)
    xn = (x - mean) * jax.lax.rsqrt(var + eps)
    xn = xn * g1_ref[...] + b1_ref[...]              # (1,C) broadcasts

    # ---------------- Multi-head self-attention ----------------
    # QKV projection: bf16 operands, f32 accumulation on the MXU.
    # 1/sqrt(head_dim) is already folded into the Q columns of wqkv (and bqkv).
    qkv = jnp.dot(xn.astype(mm), wqkv_ref[...],
                  preferred_element_type=f32)        # (N, 3C) f32
    if has_qkv_bias:
        qkv = qkv + bqkv_ref[...]

    q = qkv[:, 0 * dim:1 * dim]
    k = qkv[:, 1 * dim:2 * dim]
    v = qkv[:, 2 * dim:3 * dim]

    # One batched contraction over all heads (no per-head Python loop).
    q = jnp.transpose(q.reshape(N, num_heads, head_dim), (1, 0, 2))   # (H, N, hd)
    k = jnp.transpose(k.reshape(N, num_heads, head_dim), (1, 0, 2))   # (H, N, hd)
    v = jnp.transpose(v.reshape(N, num_heads, head_dim), (1, 0, 2))   # (H, N, hd)

    s = jnp.einsum("hnd,hmd->hnm", q.astype(mm), k.astype(mm),
                   preferred_element_type=f32)                        # (H, N, N)

    # Softmax with normalization deferred past the PV matmul:
    # exp + approximate reciprocal route to the EUP slot; the normalization
    # multiply runs on (H, N, hd) instead of (H, N, N).
    s_max = jnp.max(s, axis=-1, keepdims=True)
    p = jnp.exp(s - s_max)                                            # unnormalized
    denom = jnp.sum(p, axis=-1, keepdims=True)                        # (H, N, 1)

    ctx = jnp.einsum("hnm,hmd->hnd", p.astype(mm), v.astype(mm),
                     preferred_element_type=f32)                      # (H, N, hd)
    ctx = ctx * pl.reciprocal(denom, approx=True)                     # normalize here

    attn_out = jnp.transpose(ctx, (1, 0, 2)).reshape(N, dim)          # (N, C)
    attn_out = jnp.dot(attn_out.astype(mm), wproj_ref[...],
                       preferred_element_type=f32) + bproj_ref[...]

    x = x + attn_out                                 # residual 1

    # ---------------- LayerNorm 2 ----------------
    mean2 = jnp.mean(x, axis=-1, keepdims=True)
    var2 = jnp.mean(jnp.square(x - mean2), axis=-1, keepdims=True)
    xn2 = (x - mean2) * jax.lax.rsqrt(var2 + eps)
    xn2 = xn2 * g2_ref[...] + b2_ref[...]

    # ---------------- MLP (fc1 -> GELU -> fc2) ----------------
    h1 = jnp.dot(xn2.astype(mm), wfc1_ref[...],
                 preferred_element_type=f32) + bfc1_ref[...]          # (N, hidden)
    h1 = jax.nn.gelu(h1, approximate=gelu_approximate)
    h2 = jnp.dot(h1.astype(mm), wfc2_ref[...],
                 preferred_element_type=f32) + bfc2_ref[...]          # (N, C)

    o_ref[0] = (x + h2).astype(o_ref.dtype)          # residual 2


@functools.lru_cache(maxsize=None)
def _vmem_limit_bytes():
    """Per-generation VMEM limit: ~100 MiB on v5e/v6e (128 MiB physical),
    48 MiB on v7x (64 MiB physical). Falls back to the conservative 48 MiB."""
    try:
        cap = int(pltpu.get_tpu_info().vmem_capacity_bytes)
    except Exception:  # only a sizing hint; safe on every generation
        cap = 64 * 1024 * 1024
    return 100 * 1024 * 1024 if cap >= 96 * 1024 * 1024 else 48 * 1024 * 1024


@functools.lru_cache(maxsize=None)
def _build_block_call(B, N, C, hidden, num_heads, out_dtype_name,
                      has_qkv_bias, gelu_approximate, vmem_limit_bytes):
    """Build (and cache) the pallas_call for a given shape/config."""
    kernel = functools.partial(
        _block_kernel, dim=C, num_heads=num_heads, eps=1e-5,
        has_qkv_bias=has_qkv_bias, gelu_approximate=gelu_approximate)

    def const_spec(shape):
        # Grid-invariant blocks: constant index_map -> DMA'd once, then resident.
        return pl.BlockSpec(shape, lambda b: (0,) * len(shape))

    return pl.pallas_call(
        kernel,
        out_shape=jax.ShapeDtypeStruct((B, N, C), jnp.dtype(out_dtype_name)),
        grid_spec=pltpu.PrefetchScalarGridSpec(
            num_scalar_prefetch=0,
            grid=(B,),
            in_specs=[
                pl.BlockSpec((1, N, C), lambda b: (b, 0, 0)),      # x
                const_spec((1, C)), const_spec((1, C)),            # norm1 gamma / beta
                const_spec((C, 3 * C)), const_spec((1, 3 * C)),    # qkv W (bf16) / b
                const_spec((C, C)), const_spec((1, C)),            # proj W (bf16) / b
                const_spec((1, C)), const_spec((1, C)),            # norm2 gamma / beta
                const_spec((C, hidden)), const_spec((1, hidden)),  # fc1 W (bf16) / b
                const_spec((hidden, C)), const_spec((1, C)),       # fc2 W (bf16) / b
            ],
            out_specs=pl.BlockSpec((1, N, C), lambda b: (b, 0, 0)),
        ),
        compiler_params=pltpu.CompilerParams(
            dimension_semantics=("parallel",),
            vmem_limit_bytes=vmem_limit_bytes,
        ),
    )


def vit_block_forward(x, kparams, *, num_heads, has_qkv_bias=False,
                      gelu_approximate=True):
    """x: (B, N, C) float32; kparams: output of prepare_kernel_params."""
    B, N, C = x.shape
    hidden = kparams["wfc1"].shape[1]
    f = _build_block_call(B, N, C, hidden, num_heads, jnp.dtype(x.dtype).name,
                          bool(has_qkv_bias), bool(gelu_approximate),
                          _vmem_limit_bytes())
    # No host sync here: lets XLA overlap successive transformer blocks.
    return f(x, kparams["g1"], kparams["b1"],
             kparams["wqkv"], kparams["bqkv"], kparams["wproj"], kparams["bproj"],
             kparams["g2"], kparams["b2"],
             kparams["wfc1"], kparams["bfc1"], kparams["wfc2"], kparams["bfc2"])


def init_params(key, dim, num_heads, mlp_ratio=4.0, qkv_bias=False):
    """PyTorch-equivalent parameters: weights stored (in, out) = nn.Linear.weight.T,
    matmul weights in bf16, biases/LN params in f32."""
    hidden = int(dim * mlp_ratio)
    ks = jax.random.split(key, 8)
    s = 0.02
    bf16 = jnp.bfloat16
    return {
        "g1": jnp.ones((1, dim), jnp.float32),
        "b1": jnp.zeros((1, dim), jnp.float32),
        "wqkv": (s * jax.random.normal(ks[0], (dim, 3 * dim), jnp.float32)).astype(bf16),
        "bqkv": (s * jax.random.normal(ks[1], (1, 3 * dim), jnp.float32)
                 if qkv_bias else jnp.zeros((1, 3 * dim), jnp.float32)),
        "wproj": (s * jax.random.normal(ks[2], (dim, dim), jnp.float32)).astype(bf16),
        "bproj": s * jax.random.normal(ks[3], (1, dim), jnp.float32),
        "g2": jnp.ones((1, dim), jnp.float32),
        "b2": jnp.zeros((1, dim), jnp.float32),
        "wfc1": (s * jax.random.normal(ks[4], (dim, hidden), jnp.float32)).astype(bf16),
        "bfc1": s * jax.random.normal(ks[5], (1, hidden), jnp.float32),
        "wfc2": (s * jax.random.normal(ks[6], (hidden, dim), jnp.float32)).astype(bf16),
        "bfc2": s * jax.random.normal(ks[7], (1, dim), jnp.float32),
    }


def prepare_kernel_params(params, num_heads):
    """Kernel-side param prep: fold 1/sqrt(head_dim) into the Q columns of the
    QKV projection (weight and bias) so the kernel never multiplies by scale."""
    dim = params["wqkv"].shape[0]
    head_dim = dim // num_heads
    scale = head_dim ** -0.5
    wqkv = params["wqkv"].astype(jnp.float32).at[:, :dim].multiply(scale)
    bqkv = params["bqkv"].astype(jnp.float32).at[:, :dim].multiply(scale)
    kp = dict(params)
    kp["wqkv"] = wqkv.astype(jnp.bfloat16)
    kp["bqkv"] = bqkv
    return kp


def _reference(x, p, num_heads, gelu_approximate):
    """Plain-JAX reference mirroring the PyTorch Block (eval mode), f32 activations."""
    B, N, C = x.shape
    hd = C // num_heads
    scale = hd ** -0.5
    f32 = jnp.float32

    def ln(y, g, b):
        m = jnp.mean(y, -1, keepdims=True)
        v = jnp.mean((y - m) ** 2, -1, keepdims=True)
        return (y - m) / jnp.sqrt(v + 1e-5) * g + b

    xn = ln(x, p["g1"], p["b1"])
    qkv = xn @ p["wqkv"].astype(f32) + p["bqkv"]
    qkv = qkv.reshape(B, N, 3, num_heads, hd).transpose(2, 0, 3, 1, 4)
    q, k, v = qkv[0], qkv[1], qkv[2]
    attn = jax.nn.softmax(jnp.einsum("bhnd,bhmd->bhnm", q, k) * scale, -1)
    o = jnp.einsum("bhnm,bhmd->bhnd", attn, v).transpose(0, 2, 1, 3).reshape(B, N, C)
    x = x + (o @ p["wproj"].astype(f32) + p["bproj"])
    xn2 = ln(x, p["g2"], p["b2"])
    h = jax.nn.gelu(xn2 @ p["wfc1"].astype(f32) + p["bfc1"],
                    approximate=gelu_approximate)
    return x + (h @ p["wfc2"].astype(f32) + p["bfc2"])


if __name__ == "__main__":
    B, N, C = 2, 8, 32
    num_heads = 4
    qkv_bias = False
    gelu_approximate = True   # tanh GELU -> EUP on v6e/v7x; False = exact erf (nn.GELU default)

    key = jax.random.PRNGKey(0)
    kx, kp = jax.random.split(key)
    x = jax.random.normal(kx, (B, N, C), jnp.float32)
    params = init_params(kp, C, num_heads, mlp_ratio=4.0, qkv_bias=qkv_bias)
    kparams = prepare_kernel_params(params, num_heads)

    out = vit_block_forward(x, kparams, num_heads=num_heads,
                            has_qkv_bias=qkv_bias,
                            gelu_approximate=gelu_approximate)
    out = jax.block_until_ready(out)

    ref = _reference(x, params, num_heads, gelu_approximate)
    assert out.shape == (B, N, C)
    # bf16 MXU operands + approx reciprocal + folded scale -> loosened tolerance.
    assert jnp.allclose(out, ref, atol=1e-2, rtol=1e-2), "mismatch vs reference"

    print("KERNEL_OK")
</pallas_src>

<mosaic_0001>
module attributes {stable_mosaic.version = 11 : i64} {
  func.func @_block_kernel(%arg0: i32, %arg1: memref<1x8x32xf32, #tpu.memory_space<vmem>>, %arg2: memref<1x32xf32, #tpu.memory_space<vmem>>, %arg3: memref<1x32xf32, #tpu.memory_space<vmem>>, %arg4: memref<32x96xbf16, #tpu.memory_space<vmem>>, %arg5: memref<1x96xf32, #tpu.memory_space<vmem>>, %arg6: memref<32x32xbf16, #tpu.memory_space<vmem>>, %arg7: memref<1x32xf32, #tpu.memory_space<vmem>>, %arg8: memref<1x32xf32, #tpu.memory_space<vmem>>, %arg9: memref<1x32xf32, #tpu.memory_space<vmem>>, %arg10: memref<32x128xbf16, #tpu.memory_space<vmem>>, %arg11: memref<1x128xf32, #tpu.memory_space<vmem>>, %arg12: memref<128x32xbf16, #tpu.memory_space<vmem>>, %arg13: memref<1x32xf32, #tpu.memory_space<vmem>>, %arg14: memref<1x8x32xf32, #tpu.memory_space<vmem>>) attributes {dimension_semantics = [#tpu.dimension_semantics<parallel>], iteration_bounds = array<i64: 2>, scalar_prefetch = 0 : i64, scratch_operands = 0 : i64, tpu.core_type = #tpu.core_type<tc>, window_params = [{transform_indices = @transform_0, window_bounds = array<i64: 1, 8, 32>}, {pipeline_mode = #tpu.pipeline_mode<synchronous>, transform_indices = @transform_1, window_bounds = array<i64: 1, 32>}, {pipeline_mode = #tpu.pipeline_mode<synchronous>, transform_indices = @transform_2, window_bounds = array<i64: 1, 32>}, {pipeline_mode = #tpu.pipeline_mode<synchronous>, transform_indices = @transform_3, window_bounds = array<i64: 32, 96>}, {pipeline_mode = #tpu.pipeline_mode<synchronous>, transform_indices = @transform_4, window_bounds = array<i64: 1, 96>}, {pipeline_mode = #tpu.pipeline_mode<synchronous>, transform_indices = @transform_5, window_bounds = array<i64: 32, 32>}, {pipeline_mode = #tpu.pipeline_mode<synchronous>, transform_indices = @transform_6, window_bounds = array<i64: 1, 32>}, {pipeline_mode = #tpu.pipeline_mode<synchronous>, transform_indices = @transform_7, window_bounds = array<i64: 1, 32>}, {pipeline_mode = #tpu.pipeline_mode<synchronous>, transform_indices = @transform_8, window_bounds = array<i64: 1, 32>}, {pipeline_mode = #tpu.pipeline_mode<synchronous>, transform_indices = @transform_9, window_bounds = array<i64: 32, 128>}, {pipeline_mode = #tpu.pipeline_mode<synchronous>, transform_indices = @transform_10, window_bounds = array<i64: 1, 128>}, {pipeline_mode = #tpu.pipeline_mode<synchronous>, transform_indices = @transform_11, window_bounds = array<i64: 128, 32>}, {pipeline_mode = #tpu.pipeline_mode<synchronous>, transform_indices = @transform_12, window_bounds = array<i64: 1, 32>}, {transform_indices = @transform_13, window_bounds = array<i64: 1, 8, 32>}]} {
    %c0 = arith.constant 0 : index
    %c0_0 = arith.constant 0 : index
    %c0_1 = arith.constant 0 : index
    %0 = vector.load %arg1[%c0, %c0_0, %c0_1] : memref<1x8x32xf32, #tpu.memory_space<vmem>>, vector<1x8x32xf32>
    %1 = vector.shape_cast %0 : vector<1x8x32xf32> to vector<8x32xf32>
    %cst = arith.constant dense<0.000000e+00> : vector<8xf32>
    %2 = vector.multi_reduction <add>, %1, %cst [1] : vector<8x32xf32> to vector<8xf32>
    %3 = vector.shape_cast %2 : vector<8xf32> to vector<8x1xf32>
    %cst_2 = arith.constant 3.200000e+01 : f32
    %4 = vector.broadcast %cst_2 : f32 to vector<8x1xf32>
    %5 = arith.divf %3, %4 : vector<8x1xf32>
    %6 = vector.broadcast %5 : vector<8x1xf32> to vector<8x32xf32>
    %7 = arith.subf %1, %6 : vector<8x32xf32>
    %8 = arith.mulf %7, %7 : vector<8x32xf32>
    %cst_3 = arith.constant dense<0.000000e+00> : vector<8xf32>
    %9 = vector.multi_reduction <add>, %8, %cst_3 [1] : vector<8x32xf32> to vector<8xf32>
    %10 = vector.shape_cast %9 : vector<8xf32> to vector<8x1xf32>
    %cst_4 = arith.constant 3.200000e+01 : f32
    %11 = vector.broadcast %cst_4 : f32 to vector<8x1xf32>
    %12 = arith.divf %10, %11 : vector<8x1xf32>
    %13 = vector.broadcast %5 : vector<8x1xf32> to vector<8x32xf32>
    %14 = arith.subf %1, %13 : vector<8x32xf32>
    %cst_5 = arith.constant 9.99999974E-6 : f32
    %15 = vector.broadcast %cst_5 : f32 to vector<8x1xf32>
    %16 = arith.addf %12, %15 : vector<8x1xf32>
    %17 = math.rsqrt %16 : vector<8x1xf32>
    %18 = vector.broadcast %17 : vector<8x1xf32> to vector<8x32xf32>
    %19 = arith.mulf %14, %18 : vector<8x32xf32>
    %c0_6 = arith.constant 0 : index
    %c0_7 = arith.constant 0 : index
    %20 = vector.load %arg2[%c0_6, %c0_7] : memref<1x32xf32, #tpu.memory_space<vmem>>, vector<1x32xf32>
    %21 = vector.broadcast %20 : vector<1x32xf32> to vector<8x32xf32>
    %22 = arith.mulf %19, %21 : vector<8x32xf32>
    %c0_8 = arith.constant 0 : index
    %c0_9 = arith.constant 0 : index
    %23 = vector.load %arg3[%c0_8, %c0_9] : memref<1x32xf32, #tpu.memory_space<vmem>>, vector<1x32xf32>
    %24 = vector.broadcast %23 : vector<1x32xf32> to vector<8x32xf32>
    %25 = arith.addf %22, %24 : vector<8x32xf32>
    %26 = arith.truncf %25 : vector<8x32xf32> to vector<8x32xbf16>
    %c0_10 = arith.constant 0 : index
    %c0_11 = arith.constant 0 : index
    %27 = vector.load %arg4[%c0_10, %c0_11] : memref<32x96xbf16, #tpu.memory_space<vmem>>, vector<32x96xbf16>
    %cst_12 = arith.constant dense<0.000000e+00> : vector<8x96xf32>
    %28 = tpu.matmul %26, %27, %cst_12 {dimension_numbers = #tpu.dot_dimension_numbers<[1], [0], [0], [1], [0, 0, 1, 1], [], []>} : vector<8x32xbf16>, vector<32x96xbf16>, vector<8x96xf32> -> vector<8x96xf32>
    %29 = vector.extract_strided_slice %28 {offsets = [0, 0], sizes = [8, 32], strides = [1, 1]} : vector<8x96xf32> to vector<8x32xf32>
    %30 = vector.extract_strided_slice %28 {offsets = [0, 32], sizes = [8, 32], strides = [1, 1]} : vector<8x96xf32> to vector<8x32xf32>
    %31 = vector.extract_strided_slice %28 {offsets = [0, 64], sizes = [8, 32], strides = [1, 1]} : vector<8x96xf32> to vector<8x32xf32>
    %32 = vector.shape_cast %29 : vector<8x32xf32> to vector<8x4x8xf32>
    %33 = tpu.transpose %32, [1, 0, 2] : vector<8x4x8xf32> -> vector<4x8x8xf32>
    %34 = vector.shape_cast %30 : vector<8x32xf32> to vector<8x4x8xf32>
    %35 = tpu.transpose %34, [1, 0, 2] : vector<8x4x8xf32> -> vector<4x8x8xf32>
    %36 = vector.shape_cast %31 : vector<8x32xf32> to vector<8x4x8xf32>
    %37 = tpu.transpose %36, [1, 0, 2] : vector<8x4x8xf32> -> vector<4x8x8xf32>
    %38 = arith.truncf %33 : vector<4x8x8xf32> to vector<4x8x8xbf16>
    %39 = arith.truncf %35 : vector<4x8x8xf32> to vector<4x8x8xbf16>
    "tpu.trace_start"() <{level = 10 : i32, message = "hnd,hmd->hnm"}> : () -> ()
    %cst_13 = arith.constant dense<0.000000e+00> : vector<4x8x8xf32>
    %40 = tpu.matmul %38, %39, %cst_13 {dimension_numbers = #tpu.dot_dimension_numbers<[2], [2], [1], [1], [0, 0, 0, 1, 1, 1], [0], [0]>} : vector<4x8x8xbf16>, vector<4x8x8xbf16>, vector<4x8x8xf32> -> vector<4x8x8xf32>
    "tpu.trace_stop"() : () -> ()
    %cst_14 = arith.constant dense<0xFF800000> : vector<4x8xf32>
    %41 = vector.multi_reduction <maximumf>, %40, %cst_14 [2] : vector<4x8x8xf32> to vector<4x8xf32>
    %42 = vector.shape_cast %41 : vector<4x8xf32> to vector<4x8x1xf32>
    %43 = vector.broadcast %42 : vector<4x8x1xf32> to vector<4x8x8xf32>
    %44 = arith.subf %40, %43 : vector<4x8x8xf32>
    %45 = math.exp %44 : vector<4x8x8xf32>
    %cst_15 = arith.constant dense<0.000000e+00> : vector<4x8xf32>
    %46 = vector.multi_reduction <add>, %45, %cst_15 [2] : vector<4x8x8xf32> to vector<4x8xf32>
    %47 = vector.shape_cast %46 : vector<4x8xf32> to vector<4x8x1xf32>
    %48 = arith.truncf %45 : vector<4x8x8xf32> to vector<4x8x8xbf16>
    %49 = arith.truncf %37 : vector<4x8x8xf32> to vector<4x8x8xbf16>
    "tpu.trace_start"() <{level = 10 : i32, message = "hnm,hmd->hnd"}> : () -> ()
    %cst_16 = arith.constant dense<0.000000e+00> : vector<4x8x8xf32>
    %50 = tpu.matmul %48, %49, %cst_16 {dimension_numbers = #tpu.dot_dimension_numbers<[2], [1], [1], [2], [0, 0, 0, 1, 1, 2], [0], [0]>} : vector<4x8x8xbf16>, vector<4x8x8xbf16>, vector<4x8x8xf32> -> vector<4x8x8xf32>
    "tpu.trace_stop"() : () -> ()
    %51 = tpu.reciprocal %47 {approx = true} : vector<4x8x1xf32> -> vector<4x8x1xf32>
    %52 = vector.broadcast %51 : vector<4x8x1xf32> to vector<4x8x8xf32>
    %53 = arith.mulf %50, %52 : vector<4x8x8xf32>
    %54 = tpu.transpose %53, [1, 0, 2] : vector<4x8x8xf32> -> vector<8x4x8xf32>
    %55 = vector.shape_cast %54 : vector<8x4x8xf32> to vector<8x32xf32>
    %56 = arith.truncf %55 : vector<8x32xf32> to vector<8x32xbf16>
    %c0_17 = arith.constant 0 : index
    %c0_18 = arith.constant 0 : index
    %57 = vector.load %arg6[%c0_17, %c0_18] : memref<32x32xbf16, #tpu.memory_space<vmem>>, vector<32x32xbf16>
    %cst_19 = arith.constant dense<0.000000e+00> : vector<8x32xf32>
    %58 = tpu.matmul %56, %57, %cst_19 {dimension_numbers = #tpu.dot_dimension_numbers<[1], [0], [0], [1], [0, 0, 1, 1], [], []>} : vector<8x32xbf16>, vector<32x32xbf16>, vector<8x32xf32> -> vector<8x32xf32>
    %c0_20 = arith.constant 0 : index
    %c0_21 = arith.constant 0 : index
    %59 = vector.load %arg7[%c0_20, %c0_21] : memref<1x32xf32, #tpu.memory_space<vmem>>, vector<1x32xf32>
    %60 = vector.broadcast %59 : vector<1x32xf32> to vector<8x32xf32>
    %61 = arith.addf %58, %60 : vector<8x32xf32>
    %62 = arith.addf %1, %61 : vector<8x32xf32>
    %cst_22 = arith.constant dense<0.000000e+00> : vector<8xf32>
    %63 = vector.multi_reduction <add>, %62, %cst_22 [1] : vector<8x32xf32> to vector<8xf32>
    %64 = vector.shape_cast %63 : vector<8xf32> to vector<8x1xf32>
    %cst_23 = arith.constant 3.200000e+01 : f32
    %65 = vector.broadcast %cst_23 : f32 to vector<8x1xf32>
    %66 = arith.divf %64, %65 : vector<8x1xf32>
    %67 = vector.broadcast %66 : vector<8x1xf32> to vector<8x32xf32>
    %68 = arith.subf %62, %67 : vector<8x32xf32>
    %69 = arith.mulf %68, %68 : vector<8x32xf32>
    %cst_24 = arith.constant dense<0.000000e+00> : vector<8xf32>
    %70 = vector.multi_reduction <add>, %69, %cst_24 [1] : vector<8x32xf32> to vector<8xf32>
    %71 = vector.shape_cast %70 : vector<8xf32> to vector<8x1xf32>
    %cst_25 = arith.constant 3.200000e+01 : f32
    %72 = vector.broadcast %cst_25 : f32 to vector<8x1xf32>
    %73 = arith.divf %71, %72 : vector<8x1xf32>
    %74 = vector.broadcast %66 : vector<8x1xf32> to vector<8x32xf32>
    %75 = arith.subf %62, %74 : vector<8x32xf32>
    %cst_26 = arith.constant 9.99999974E-6 : f32
    %76 = vector.broadcast %cst_26 : f32 to vector<8x1xf32>
    %77 = arith.addf %73, %76 : vector<8x1xf32>
    %78 = math.rsqrt %77 : vector<8x1xf32>
    %79 = vector.broadcast %78 : vector<8x1xf32> to vector<8x32xf32>
    %80 = arith.mulf %75, %79 : vector<8x32xf32>
    %c0_27 = arith.constant 0 : index
    %c0_28 = arith.constant 0 : index
    %81 = vector.load %arg8[%c0_27, %c0_28] : memref<1x32xf32, #tpu.memory_space<vmem>>, vector<1x32xf32>
    %82 = vector.broadcast %81 : vector<1x32xf32> to vector<8x32xf32>
    %83 = arith.mulf %80, %82 : vector<8x32xf32>
    %c0_29 = arith.constant 0 : index
    %c0_30 = arith.constant 0 : index
    %84 = vector.load %arg9[%c0_29, %c0_30] : memref<1x32xf32, #tpu.memory_space<vmem>>, vector<1x32xf32>
    %85 = vector.broadcast %84 : vector<1x32xf32> to vector<8x32xf32>
    %86 = arith.addf %83, %85 : vector<8x32xf32>
    %87 = arith.truncf %86 : vector<8x32xf32> to vector<8x32xbf16>
    %c0_31 = arith.constant 0 : index
    %c0_32 = arith.constant 0 : index
    %88 = vector.load %arg10[%c0_31, %c0_32] : memref<32x128xbf16, #tpu.memory_space<vmem>>, vector<32x128xbf16>
    %cst_33 = arith.constant dense<0.000000e+00> : vector<8x128xf32>
    %89 = tpu.matmul %87, %88, %cst_33 {dimension_numbers = #tpu.dot_dimension_numbers<[1], [0], [0], [1], [0, 0, 1, 1], [], []>} : vector<8x32xbf16>, vector<32x128xbf16>, vector<8x128xf32> -> vector<8x128xf32>
    %c0_34 = arith.constant 0 : index
    %c0_35 = arith.constant 0 : index
    %90 = vector.load %arg11[%c0_34, %c0_35] : memref<1x128xf32, #tpu.memory_space<vmem>>, vector<1x128xf32>
    %91 = vector.broadcast %90 : vector<1x128xf32> to vector<8x128xf32>
    %92 = arith.addf %89, %91 : vector<8x128xf32>
    %93 = arith.mulf %92, %92 : vector<8x128xf32>
    %94 = arith.mulf %92, %93 : vector<8x128xf32>
    %cst_36 = arith.constant 4.471500e-02 : f32
    %95 = vector.broadcast %cst_36 : f32 to vector<8x128xf32>
    %96 = arith.mulf %95, %94 : vector<8x128xf32>
    %97 = arith.addf %92, %96 : vector<8x128xf32>
    %cst_37 = arith.constant 0.797884583 : f32
    %98 = vector.broadcast %cst_37 : f32 to vector<8x128xf32>
    %99 = arith.mulf %98, %97 : vector<8x128xf32>
    %100 = math.tanh %99 : vector<8x128xf32>
    %cst_38 = arith.constant 1.000000e+00 : f32
    %101 = vector.broadcast %cst_38 : f32 to vector<8x128xf32>
    %102 = arith.addf %101, %100 : vector<8x128xf32>
    %cst_39 = arith.constant 5.000000e-01 : f32
    %103 = vector.broadcast %cst_39 : f32 to vector<8x128xf32>
    %104 = arith.mulf %103, %102 : vector<8x128xf32>
    %105 = arith.mulf %92, %104 : vector<8x128xf32>
    %106 = arith.truncf %105 : vector<8x128xf32> to vector<8x128xbf16>
    %c0_40 = arith.constant 0 : index
    %c0_41 = arith.constant 0 : index
    %107 = vector.load %arg12[%c0_40, %c0_41] : memref<128x32xbf16, #tpu.memory_space<vmem>>, vector<128x32xbf16>
    %cst_42 = arith.constant dense<0.000000e+00> : vector<8x32xf32>
    %108 = tpu.matmul %106, %107, %cst_42 {dimension_numbers = #tpu.dot_dimension_numbers<[1], [0], [0], [1], [0, 0, 1, 1], [], []>} : vector<8x128xbf16>, vector<128x32xbf16>, vector<8x32xf32> -> vector<8x32xf32>
    %c0_43 = arith.constant 0 : index
    %c0_44 = arith.constant 0 : index
    %109 = vector.load %arg13[%c0_43, %c0_44] : memref<1x32xf32, #tpu.memory_space<vmem>>, vector<1x32xf32>
    %110 = vector.broadcast %109 : vector<1x32xf32> to vector<8x32xf32>
    %111 = arith.addf %108, %110 : vector<8x32xf32>
    %112 = arith.addf %62, %111 : vector<8x32xf32>
    %c0_45 = arith.constant 0 : index
    %c0_46 = arith.constant 0 : index
    %c0_47 = arith.constant 0 : index
    %113 = vector.load %arg14[%c0_45, %c0_46, %c0_47] : memref<1x8x32xf32, #tpu.memory_space<vmem>>, vector<1x8x32xf32>
    %114 = vector.shape_cast %113 : vector<1x8x32xf32> to vector<8x32xf32>
    %115 = vector.shape_cast %112 : vector<8x32xf32> to vector<1x8x32xf32>
    tpu.vector_store %arg14[%c0_45, %c0_46, %c0_47], %115 {strides = array<i32>} : memref<1x8x32xf32, #tpu.memory_space<vmem>>, vector<1x8x32xf32>,
    return
  }
  func.func @transform_0(%arg0: i32) -> (i32, i32, i32) {
    %c0_i32 = arith.constant 0 : i32
    %c0_i32_0 = arith.constant 0 : i32
    %c0_i32_1 = arith.constant 0 : i32
    return %arg0, %c0_i32, %c0_i32_0 : i32, i32, i32
  }
  func.func @transform_1(%arg0: i32) -> (i32, i32) {
    %c0_i32 = arith.constant 0 : i32
    %c0_i32_0 = arith.constant 0 : i32
    %c0_i32_1 = arith.constant 0 : i32
    return %c0_i32, %c0_i32_0 : i32, i32
  }
  func.func @transform_2(%arg0: i32) -> (i32, i32) {
    %c0_i32 = arith.constant 0 : i32
    %c0_i32_0 = arith.constant 0 : i32
    %c0_i32_1 = arith.constant 0 : i32
    return %c0_i32, %c0_i32_0 : i32, i32
  }
  func.func @transform_3(%arg0: i32) -> (i32, i32) {
    %c0_i32 = arith.constant 0 : i32
    %c0_i32_0 = arith.constant 0 : i32
    %c0_i32_1 = arith.constant 0 : i32
    return %c0_i32, %c0_i32_0 : i32, i32
  }
  func.func @transform_4(%arg0: i32) -> (i32, i32) {
    %c0_i32 = arith.constant 0 : i32
    %c0_i32_0 = arith.constant 0 : i32
    %c0_i32_1 = arith.constant 0 : i32
    return %c0_i32, %c0_i32_0 : i32, i32
  }
  func.func @transform_5(%arg0: i32) -> (i32, i32) {
    %c0_i32 = arith.constant 0 : i32
    %c0_i32_0 = arith.constant 0 : i32
    %c0_i32_1 = arith.constant 0 : i32
    return %c0_i32, %c0_i32_0 : i32, i32
  }
  func.func @transform_6(%arg0: i32) -> (i32, i32) {
    %c0_i32 = arith.constant 0 : i32
    %c0_i32_0 = arith.constant 0 : i32
    %c0_i32_1 = arith.constant 0 : i32
    return %c0_i32, %c0_i32_0 : i32, i32
  }
  func.func @transform_7(%arg0: i32) -> (i32, i32) {
    %c0_i32 = arith.constant 0 : i32
    %c0_i32_0 = arith.constant 0 : i32
    %c0_i32_1 = arith.constant 0 : i32
    return %c0_i32, %c0_i32_0 : i32, i32
  }
  func.func @transform_8(%arg0: i32) -> (i32, i32) {
    %c0_i32 = arith.constant 0 : i32
    %c0_i32_0 = arith.constant 0 : i32
    %c0_i32_1 = arith.constant 0 : i32
    return %c0_i32, %c0_i32_0 : i32, i32
  }
  func.func @transform_9(%arg0: i32) -> (i32, i32) {
    %c0_i32 = arith.constant 0 : i32
    %c0_i32_0 = arith.constant 0 : i32
    %c0_i32_1 = arith.constant 0 : i32
    return %c0_i32, %c0_i32_0 : i32, i32
  }
  func.func @transform_10(%arg0: i32) -> (i32, i32) {
    %c0_i32 = arith.constant 0 : i32
    %c0_i32_0 = arith.constant 0 : i32
    %c0_i32_1 = arith.constant 0 : i32
    return %c0_i32, %c0_i32_0 : i32, i32
  }
  func.func @transform_11(%arg0: i32) -> (i32, i32) {
    %c0_i32 = arith.constant 0 : i32
    %c0_i32_0 = arith.constant 0 : i32
    %c0_i32_1 = arith.constant 0 : i32
    return %c0_i32, %c0_i32_0 : i32, i32
  }
  func.func @transform_12(%arg0: i32) -> (i32, i32) {
    %c0_i32 = arith.constant 0 : i32
    %c0_i32_0 = arith.constant 0 : i32
    %c0_i32_1 = arith.constant 0 : i32
    return %c0_i32, %c0_i32_0 : i32, i32
  }
  func.func @transform_13(%arg0: i32) -> (i32, i32, i32) {
    %c0_i32 = arith.constant 0 : i32
    %c0_i32_0 = arith.constant 0 : i32
    %c0_i32_1 = arith.constant 0 : i32
    return %arg0, %c0_i32, %c0_i32_0 : i32, i32, i32
  }
}

</mosaic_0001>

<llo_original>
// kernel: tpu_custom_call.1
$region0: #{tpu_custom_call.1}
  #allocation0 [shape = 'u32[]', space=smem, size = 0x4, offset = 0x4, fixed_abs, tag = 'smem constant byte address 0x4 - core index']
  #allocation1 [shape = 'u32[72,128]{1,0:T(1,128)}', space=vmem, size = 0x9000, scoped, tag = 'internal scratch']
  %s0 = inlined_call_operand.vmem [shape: f32[2,8,32], index: 0, kind: input, shape index: {}]
  %s1 = inlined_call_operand.vmem [shape: f32[1,32], index: 1, kind: input, shape index: {}]
  %s2 = inlined_call_operand.vmem [shape: f32[1,32], index: 2, kind: input, shape index: {}]
  %s3 = inlined_call_operand.vmem [shape: bf16[32,96], index: 3, kind: input, shape index: {}]
  %s4 = inlined_call_operand.vmem [shape: f32[1,96], index: 4, kind: input, shape index: {}]
  %s5 = inlined_call_operand.vmem [shape: bf16[32,32], index: 5, kind: input, shape index: {}]
  %s6 = inlined_call_operand.vmem [shape: f32[1,32], index: 6, kind: input, shape index: {}]
  %s7 = inlined_call_operand.vmem [shape: f32[1,32], index: 7, kind: input, shape index: {}]
  %s8 = inlined_call_operand.vmem [shape: f32[1,32], index: 8, kind: input, shape index: {}]
  %s9 = inlined_call_operand.vmem [shape: bf16[32,128], index: 9, kind: input, shape index: {}]
  %s10 = inlined_call_operand.vmem [shape: f32[1,128], index: 10, kind: input, shape index: {}]
  %s11 = inlined_call_operand.vmem [shape: bf16[128,32], index: 11, kind: input, shape index: {}]
  %s12 = inlined_call_operand.vmem [shape: f32[1,32], index: 12, kind: input, shape index: {}]
  %s13 = inlined_call_operand.hbm [shape: f32[2,8,32], index: 13, kind: output, shape index: {}]
  %s14 = sld [smem:[#allocation0]]
  $region85: #{tpu_custom_call.1} parent=0
    _
  %s16 = ssub.s32 1, %s14
  %s17 = scalar_select 0, %s16, %s14
  $region1: #{tpu_custom_call.1} parent=0
    #allocation2 [shape = 'u8[8192]{0}', space=vmem, size = 0x2000, scoped, tag = 'output window, operand 0']
    #allocation3 [shape = 's32[2]{0}', space=sflag, size = 0x8, scoped, tag = 'scoped memory for tpu_custom_call.1']
    %18 = vsyncpa [#allocation3], 0
    %s19 = scalar_lea.sflag [#allocation3], 1
    %20 = vsyncpa %s19, 0
    loop: start=0, step=1, limit=4
    $region2: #{tpu_custom_call.1} parent=1 // loop_pre_header
      _
    $region3: #{tpu_custom_call.1} parent=1 // loop_header
      %s22 = sphi 0, %s26
      %p23 = scmp.ge.s32.totalorder %s22, 4
      %s32 = sphi 0, %s34
      %s35 = sphi 0, %s32
      %s36 = sphi 0, %s35
      %s52 = sphi 0, %s36
      %s56 = sphi 0, %s56
      %s58 = sphi 0, %s56
      %s59 = sphi 0, %s58
      %s73 = sphi 0, %s59
      %s77 = sphi 0, %s77
      %s79 = sphi 0, %s77
      %s80 = sphi 0, %s79
      %s94 = sphi 0, %s80
      %s98 = sphi 0, %s98
      %s100 = sphi 0, %s98
      %s101 = sphi 0, %s100
      %s115 = sphi 0, %s101
      %s119 = sphi 0, %s119
      %s121 = sphi 0, %s119
      %s122 = sphi 0, %s121
      %s136 = sphi 0, %s122
      %s140 = sphi 0, %s140
      %s142 = sphi 0, %s140
      %s143 = sphi 0, %s142
      %s157 = sphi 0, %s143
      %s161 = sphi 0, %s161
      %s163 = sphi 0, %s161
      %s164 = sphi 0, %s163
      %s178 = sphi 0, %s164
      %s182 = sphi 0, %s182
      %s184 = sphi 0, %s182
      %s185 = sphi 0, %s184
      %s199 = sphi 0, %s185
      %s203 = sphi 0, %s203
      %s205 = sphi 0, %s203
      %s206 = sphi 0, %s205
      %s220 = sphi 0, %s206
      %s224 = sphi 0, %s224
      %s226 = sphi 0, %s224
      %s227 = sphi 0, %s226
      %s241 = sphi 0, %s227
      %s245 = sphi 0, %s245
      %s247 = sphi 0, %s245
      %s248 = sphi 0, %s247
      %s262 = sphi 0, %s248
      %s266 = sphi 0, %s266
      %s268 = sphi 0, %s266
      %s269 = sphi 0, %s268
      %s283 = sphi 0, %s269
      %s287 = sphi 0, %s287
      %s289 = sphi 0, %s287
      %s290 = sphi 0, %s289
      %s304 = sphi 0, %s290
      %s310 = sphi 0, %s312
      %s313 = sphi 0, %s310
      %s314 = sphi 0, %s313
      %s330 = sphi 0, %s314
    $region4: #{tpu_custom_call.1} parent=1 // loop_header_branch
      %25 = sbr.rel (%p23) target = $region8
    $region5: #{tpu_custom_call.1} parent=1 // loop_body
      %s27 = ssub.s32 %s22, 1
      %s28 = ssub.s32 %s22, 2
      %s29 = sadd.s32 %s22, 1
      %s30 = ssub.s32 %s22, %s29
      %p31 = scmp.eq.s32.totalorder %s30, 0
      %s33 = sadd.s32 %s32, 1
      %s34 = scalar_select %p31, %s32, %s33
      %p37 = pneg %p31
      %p38 = scmp.eq.s32.totalorder %s22, 1
      %p39 = por %p37, %p38
      %p40 = scmp.ne.s32.totalorder %s32, %s35
      %p41 = scmp.eq.s32.totalorder %s22, 0
      %p42 = por %p40, %p41
      %p43 = scmp.ne.s32.totalorder %s32, %s35
      %p44 = scmp.eq.s32.totalorder %s27, 1
      %p45 = por %p43, %p44
      %p46 = scmp.ne.s32.totalorder %s35, %s36
      %p47 = scmp.eq.s32.totalorder %s27, 0
      %p48 = por %p46, %p47
      %p49 = scmp.ne.s32.totalorder %s35, %s36
      %p50 = scmp.eq.s32.totalorder %s28, 1
      %p51 = por %p49, %p50
      %p53 = scmp.ne.s32.totalorder %s36, %s52
      %p54 = scmp.eq.s32.totalorder %s28, 0
      %p55 = por %p53, %p54
      %s57 = sadd.s32 %s56, 1
      %p60 = scmp.eq.s32.totalorder %s22, 1
      %p61 = scmp.ne.s32.totalorder %s56, %s58
      %p62 = scmp.eq.s32.totalorder %s22, 0
      %p63 = por %p61, %p62
      %p64 = scmp.ne.s32.totalorder %s56, %s58
      %p65 = scmp.eq.s32.totalorder %s27, 1
      %p66 = por %p64, %p65
      %p67 = scmp.ne.s32.totalorder %s58, %s59
      %p68 = scmp.eq.s32.totalorder %s27, 0
      %p69 = por %p67, %p68
      %p70 = scmp.ne.s32.totalorder %s58, %s59
      %p71 = scmp.eq.s32.totalorder %s28, 1
      %p72 = por %p70, %p71
      %p74 = scmp.ne.s32.totalorder %s59, %s73
      %p75 = scmp.eq.s32.totalorder %s28, 0
      %p76 = por %p74, %p75
      %s78 = sadd.s32 %s77, 1
      %p81 = scmp.eq.s32.totalorder %s22, 1
      %p82 = scmp.ne.s32.totalorder %s77, %s79
      %p83 = scmp.eq.s32.totalorder %s22, 0
      %p84 = por %p82, %p83
      %p85 = scmp.ne.s32.totalorder %s77, %s79
      %p86 = scmp.eq.s32.totalorder %s27, 1
      %p87 = por %p85, %p86
      %p88 = scmp.ne.s32.totalorder %s79, %s80
      %p89 = scmp.eq.s32.totalorder %s27, 0
      %p90 = por %p88, %p89
      %p91 = scmp.ne.s32.totalorder %s79, %s80
      %p92 = scmp.eq.s32.totalorder %s28, 1
      %p93 = por %p91, %p92
      %p95 = scmp.ne.s32.totalorder %s80, %s94
      %p96 = scmp.eq.s32.totalorder %s28, 0
      %p97 = por %p95, %p96
      %s99 = sadd.s32 %s98, 1
      %p102 = scmp.eq.s32.totalorder %s22, 1
      %p103 = scmp.ne.s32.totalorder %s98, %s100
      %p104 = scmp.eq.s32.totalorder %s22, 0
      %p105 = por %p103, %p104
      %p106 = scmp.ne.s32.totalorder %s98, %s100
      %p107 = scmp.eq.s32.totalorder %s27, 1
      %p108 = por %p106, %p107
      %p109 = scmp.ne.s32.totalorder %s100, %s101
      %p110 = scmp.eq.s32.totalorder %s27, 0
      %p111 = por %p109, %p110
      %p112 = scmp.ne.s32.totalorder %s100, %s101
      %p113 = scmp.eq.s32.totalorder %s28, 1
      %p114 = por %p112, %p113
      %p116 = scmp.ne.s32.totalorder %s101, %s115
      %p117 = scmp.eq.s32.totalorder %s28, 0
      %p118 = por %p116, %p117
      %s120 = sadd.s32 %s119, 1
      %p123 = scmp.eq.s32.totalorder %s22, 1
      %p124 = scmp.ne.s32.totalorder %s119, %s121
      %p125 = scmp.eq.s32.totalorder %s22, 0
      %p126 = por %p124, %p125
      %p127 = scmp.ne.s32.totalorder %s119, %s121
      %p128 = scmp.eq.s32.totalorder %s27, 1
      %p129 = por %p127, %p128
      %p130 = scmp.ne.s32.totalorder %s121, %s122
      %p131 = scmp.eq.s32.totalorder %s27, 0
      %p132 = por %p130, %p131
      %p133 = scmp.ne.s32.totalorder %s121, %s122
      %p134 = scmp.eq.s32.totalorder %s28, 1
      %p135 = por %p133, %p134
      %p137 = scmp.ne.s32.totalorder %s122, %s136
      %p138 = scmp.eq.s32.totalorder %s28, 0
      %p139 = por %p137, %p138
      %s141 = sadd.s32 %s140, 1
      %p144 = scmp.eq.s32.totalorder %s22, 1
      %p145 = scmp.ne.s32.totalorder %s140, %s142
      %p146 = scmp.eq.s32.totalorder %s22, 0
      %p147 = por %p145, %p146
      %p148 = scmp.ne.s32.totalorder %s140, %s142
      %p149 = scmp.eq.s32.totalorder %s27, 1
      %p150 = por %p148, %p149
      %p151 = scmp.ne.s32.totalorder %s142, %s143
      %p152 = scmp.eq.s32.totalorder %s27, 0
      %p153 = por %p151, %p152
      %p154 = scmp.ne.s32.totalorder %s142, %s143
      %p155 = scmp.eq.s32.totalorder %s28, 1
      %p156 = por %p154, %p155
      %p158 = scmp.ne.s32.totalorder %s143, %s157
      %p159 = scmp.eq.s32.totalorder %s28, 0
      %p160 = por %p158, %p159
      %s162 = sadd.s32 %s161, 1
      %p165 = scmp.eq.s32.totalorder %s22, 1
      %p166 = scmp.ne.s32.totalorder %s161, %s163
      %p167 = scmp.eq.s32.totalorder %s22, 0
      %p168 = por %p166, %p167
      %p169 = scmp.ne.s32.totalorder %s161, %s163
      %p170 = scmp.eq.s32.totalorder %s27, 1
      %p171 = por %p169, %p170
      %p172 = scmp.ne.s32.totalorder %s163, %s164
      %p173 = scmp.eq.s32.totalorder %s27, 0
      %p174 = por %p172, %p173
      %p175 = scmp.ne.s32.totalorder %s163, %s164
      %p176 = scmp.eq.s32.totalorder %s28, 1
      %p177 = por %p175, %p176
      %p179 = scmp.ne.s32.totalorder %s164, %s178
      %p180 = scmp.eq.s32.totalorder %s28, 0
      %p181 = por %p179, %p180
      %s183 = sadd.s32 %s182, 1
      %p186 = scmp.eq.s32.totalorder %s22, 1
      %p187 = scmp.ne.s32.totalorder %s182, %s184
      %p188 = scmp.eq.s32.totalorder %s22, 0
      %p189 = por %p187, %p188
      %p190 = scmp.ne.s32.totalorder %s182, %s184
      %p191 = scmp.eq.s32.totalorder %s27, 1
      %p192 = por %p190, %p191
      %p193 = scmp.ne.s32.totalorder %s184, %s185
      %p194 = scmp.eq.s32.totalorder %s27, 0
      %p195 = por %p193, %p194
      %p196 = scmp.ne.s32.totalorder %s184, %s185
      %p197 = scmp.eq.s32.totalorder %s28, 1
      %p198 = por %p196, %p197
      %p200 = scmp.ne.s32.totalorder %s185, %s199
      %p201 = scmp.eq.s32.totalorder %s28, 0
      %p202 = por %p200, %p201
      %s204 = sadd.s32 %s203, 1
      %p207 = scmp.eq.s32.totalorder %s22, 1
      %p208 = scmp.ne.s32.totalorder %s203, %s205
      %p209 = scmp.eq.s32.totalorder %s22, 0
      %p210 = por %p208, %p209
      %p211 = scmp.ne.s32.totalorder %s203, %s205
      %p212 = scmp.eq.s32.totalorder %s27, 1
      %p213 = por %p211, %p212
      %p214 = scmp.ne.s32.totalorder %s205, %s206
      %p215 = scmp.eq.s32.totalorder %s27, 0
      %p216 = por %p214, %p215
      %p217 = scmp.ne.s32.totalorder %s205, %s206
      %p218 = scmp.eq.s32.totalorder %s28, 1
      %p219 = por %p217, %p218
      %p221 = scmp.ne.s32.totalorder %s206, %s220
      %p222 = scmp.eq.s32.totalorder %s28, 0
      %p223 = por %p221, %p222
      %s225 = sadd.s32 %s224, 1
      %p228 = scmp.eq.s32.totalorder %s22, 1
      %p229 = scmp.ne.s32.totalorder %s224, %s226
      %p230 = scmp.eq.s32.totalorder %s22, 0
      %p231 = por %p229, %p230
      %p232 = scmp.ne.s32.totalorder %s224, %s226
      %p233 = scmp.eq.s32.totalorder %s27, 1
      %p234 = por %p232, %p233
      %p235 = scmp.ne.s32.totalorder %s226, %s227
      %p236 = scmp.eq.s32.totalorder %s27, 0
      %p237 = por %p235, %p236
      %p238 = scmp.ne.s32.totalorder %s226, %s227
      %p239 = scmp.eq.s32.totalorder %s28, 1
      %p240 = por %p238, %p239
      %p242 = scmp.ne.s32.totalorder %s227, %s241
      %p243 = scmp.eq.s32.totalorder %s28, 0
      %p244 = por %p242, %p243
      %s246 = sadd.s32 %s245, 1
      %p249 = scmp.eq.s32.totalorder %s22, 1
      %p250 = scmp.ne.s32.totalorder %s245, %s247
      %p251 = scmp.eq.s32.totalorder %s22, 0
      %p252 = por %p250, %p251
      %p253 = scmp.ne.s32.totalorder %s245, %s247
      %p254 = scmp.eq.s32.totalorder %s27, 1
      %p255 = por %p253, %p254
      %p256 = scmp.ne.s32.totalorder %s247, %s248
      %p257 = scmp.eq.s32.totalorder %s27, 0
      %p258 = por %p256, %p257
      %p259 = scmp.ne.s32.totalorder %s247, %s248
      %p260 = scmp.eq.s32.totalorder %s28, 1
      %p261 = por %p259, %p260
      %p263 = scmp.ne.s32.totalorder %s248, %s262
      %p264 = scmp.eq.s32.totalorder %s28, 0
      %p265 = por %p263, %p264
      %s267 = sadd.s32 %s266, 1
      %p270 = scmp.eq.s32.totalorder %s22, 1
      %p271 = scmp.ne.s32.totalorder %s266, %s268
      %p272 = scmp.eq.s32.totalorder %s22, 0
      %p273 = por %p271, %p272
      %p274 = scmp.ne.s32.totalorder %s266, %s268
      %p275 = scmp.eq.s32.totalorder %s27, 1
      %p276 = por %p274, %p275
      %p277 = scmp.ne.s32.totalorder %s268, %s269
      %p278 = scmp.eq.s32.totalorder %s27, 0
      %p279 = por %p277, %p278
      %p280 = scmp.ne.s32.totalorder %s268, %s269
      %p281 = scmp.eq.s32.totalorder %s28, 1
      %p282 = por %p280, %p281
      %p284 = scmp.ne.s32.totalorder %s269, %s283
      %p285 = scmp.eq.s32.totalorder %s28, 0
      %p286 = por %p284, %p285
      %s288 = sadd.s32 %s287, 1
      %p291 = scmp.eq.s32.totalorder %s22, 1
      %p292 = scmp.ne.s32.totalorder %s287, %s289
      %p293 = scmp.eq.s32.totalorder %s22, 0
      %p294 = por %p292, %p293
      %p295 = scmp.ne.s32.totalorder %s287, %s289
      %p296 = scmp.eq.s32.totalorder %s27, 1
      %p297 = por %p295, %p296
      %p298 = scmp.ne.s32.totalorder %s289, %s290
      %p299 = scmp.eq.s32.totalorder %s27, 0
      %p300 = por %p298, %p299
      %p301 = scmp.ne.s32.totalorder %s289, %s290
      %p302 = scmp.eq.s32.totalorder %s28, 1
      %p303 = por %p301, %p302
      %p305 = scmp.ne.s32.totalorder %s290, %s304
      %p306 = scmp.eq.s32.totalorder %s28, 0
      %p307 = por %p305, %p306
      %s308 = ssub.s32 %s22, %s29
      %p309 = scmp.eq.s32.totalorder %s308, 0
      %s311 = sadd.s32 %s310, 1
      %s312 = scalar_select %p309, %s310, %s311
      %p315 = pneg %p309
      %p316 = scmp.eq.s32.totalorder %s22, 1
      %p317 = por %p315, %p316
      %p318 = scmp.ne.s32.totalorder %s310, %s313
      %p319 = scmp.eq.s32.totalorder %s22, 0
      %p320 = por %p318, %p319
      %p321 = scmp.ne.s32.totalorder %s310, %s313
      %p322 = scmp.eq.s32.totalorder %s27, 1
      %p323 = por %p321, %p322
      %p324 = scmp.ne.s32.totalorder %s313, %s314
      %p325 = scmp.eq.s32.totalorder %s27, 0
      %p326 = por %p324, %p325
      %p327 = scmp.ne.s32.totalorder %s313, %s314
      %p328 = scmp.eq.s32.totalorder %s28, 1
      %p329 = por %p327, %p328
      %p331 = scmp.ne.s32.totalorder %s314, %s330
      %p332 = scmp.eq.s32.totalorder %s28, 0
      %p333 = por %p331, %p332
      %p334 = scmp.le.s32.totalorder 1, %s22
      %p335 = scmp.lt.s32.totalorder %s22, 3
      %p336 = pnand %p334, %p335
      %p337 = pneg %p336
      // Predicated region
      $region9: #{tpu_custom_call.1} parent=5 // pred_check
        _
      $region10: #{tpu_custom_call.1} parent=5 // pred_check_branch
        %339 = sbr.rel (%p336) target = $region12
      $region11: #{tpu_custom_call.1} parent=5 // pred_region
        %s340 = ssub.s32 %s22, 1
        // Predicated region
        $region13: #{tpu_custom_call.1} parent=11 // pred_check
          %p341 = pneg %p69
        $region14: #{tpu_custom_call.1} parent=11 // pred_check_branch
          %343 = sbr.rel (%p341) target = $region16
        $region15: #{tpu_custom_call.1} parent=11 // pred_region
          _
        $region16: #{tpu_custom_call.1} parent=11 // pred_fallthru
          _
        // Predicated region
        $region17: #{tpu_custom_call.1} parent=11 // pred_check
          %p344 = pneg %p90
        $region18: #{tpu_custom_call.1} parent=11 // pred_check_branch
          %346 = sbr.rel (%p344) target = $region20
        $region19: #{tpu_custom_call.1} parent=11 // pred_region
          _
        $region20: #{tpu_custom_call.1} parent=11 // pred_fallthru
          _
        // Predicated region
        $region21: #{tpu_custom_call.1} parent=11 // pred_check
          %p347 = pneg %p111
        $region22: #{tpu_custom_call.1} parent=11 // pred_check_branch
          %349 = sbr.rel (%p347) target = $region24
        $region23: #{tpu_custom_call.1} parent=11 // pred_region
          _
        $region24: #{tpu_custom_call.1} parent=11 // pred_fallthru
          _
        // Predicated region
        $region25: #{tpu_custom_call.1} parent=11 // pred_check
          %p350 = pneg %p132
        $region26: #{tpu_custom_call.1} parent=11 // pred_check_branch
          %352 = sbr.rel (%p350) target = $region28
        $region27: #{tpu_custom_call.1} parent=11 // pred_region
          _
        $region28: #{tpu_custom_call.1} parent=11 // pred_fallthru
          _
        // Predicated region
        $region29: #{tpu_custom_call.1} parent=11 // pred_check
          %p353 = pneg %p153
        $region30: #{tpu_custom_call.1} parent=11 // pred_check_branch
          %355 = sbr.rel (%p353) target = $region32
        $region31: #{tpu_custom_call.1} parent=11 // pred_region
          _
        $region32: #{tpu_custom_call.1} parent=11 // pred_fallthru
          _
        // Predicated region
        $region33: #{tpu_custom_call.1} parent=11 // pred_check
          %p356 = pneg %p174
        $region34: #{tpu_custom_call.1} parent=11 // pred_check_branch
          %358 = sbr.rel (%p356) target = $region36
        $region35: #{tpu_custom_call.1} parent=11 // pred_region
          _
        $region36: #{tpu_custom_call.1} parent=11 // pred_fallthru
          _
        // Predicated region
        $region37: #{tpu_custom_call.1} parent=11 // pred_check
          %p359 = pneg %p195
        $region38: #{tpu_custom_call.1} parent=11 // pred_check_branch
          %361 = sbr.rel (%p359) target = $region40
        $region39: #{tpu_custom_call.1} parent=11 // pred_region
          _
        $region40: #{tpu_custom_call.1} parent=11 // pred_fallthru
          _
        // Predicated region
        $region41: #{tpu_custom_call.1} parent=11 // pred_check
          %p362 = pneg %p216
        $region42: #{tpu_custom_call.1} parent=11 // pred_check_branch
          %364 = sbr.rel (%p362) target = $region44
        $region43: #{tpu_custom_call.1} parent=11 // pred_region
          _
        $region44: #{tpu_custom_call.1} parent=11 // pred_fallthru
          _
        // Predicated region
        $region45: #{tpu_custom_call.1} parent=11 // pred_check
          %p365 = pneg %p237
        $region46: #{tpu_custom_call.1} parent=11 // pred_check_branch
          %367 = sbr.rel (%p365) target = $region48
        $region47: #{tpu_custom_call.1} parent=11 // pred_region
          _
        $region48: #{tpu_custom_call.1} parent=11 // pred_fallthru
          _
        // Predicated region
        $region49: #{tpu_custom_call.1} parent=11 // pred_check
          %p368 = pneg %p258
        $region50: #{tpu_custom_call.1} parent=11 // pred_check_branch
          %370 = sbr.rel (%p368) target = $region52
        $region51: #{tpu_custom_call.1} parent=11 // pred_region
          _
        $region52: #{tpu_custom_call.1} parent=11 // pred_fallthru
          _
        // Predicated region
        $region53: #{tpu_custom_call.1} parent=11 // pred_check
          %p371 = pneg %p279
        $region54: #{tpu_custom_call.1} parent=11 // pred_check_branch
          %373 = sbr.rel (%p371) target = $region56
        $region55: #{tpu_custom_call.1} parent=11 // pred_region
          _
        $region56: #{tpu_custom_call.1} parent=11 // pred_fallthru
          _
        // Predicated region
        $region57: #{tpu_custom_call.1} parent=11 // pred_check
          %p374 = pneg %p300
        $region58: #{tpu_custom_call.1} parent=11 // pred_check_branch
          %376 = sbr.rel (%p374) target = $region60
        $region59: #{tpu_custom_call.1} parent=11 // pred_region
          _
        $region60: #{tpu_custom_call.1} parent=11 // pred_fallthru
          _
      $region12: #{tpu_custom_call.1} parent=5 // pred_fallthru
        _
      %p377 = scmp.lt.s32.totalorder %s22, 2
      // Predicated region
      $region61: #{tpu_custom_call.1} parent=5 // pred_check
        %p378 = pneg %p377
      $region62: #{tpu_custom_call.1} parent=5 // pred_check_branch
        %380 = sbr.rel (%p378) target = $region64
      $region63: #{tpu_custom_call.1} parent=5 // pred_region
        // Predicated region
        $region65: #{tpu_custom_call.1} parent=63 // pred_check
          %p381 = pneg %p42
        $region66: #{tpu_custom_call.1} parent=63 // pred_check_branch
          %383 = sbr.rel (%p381) target = $region68
        $region67: #{tpu_custom_call.1} parent=63 // pred_region
          %p384 = scmp.lt.s32.totalorder %s22, 1
          %s385 = scalar_select %p384, %s22, 1
          %s386 = smul.addr %s385, 8
          %s387 = scalar_lea.vmem %s0, %s386
        $region68: #{tpu_custom_call.1} parent=63 // pred_fallthru
          _
      $region64: #{tpu_custom_call.1} parent=5 // pred_fallthru
        _
      %p388 = scmp.le.s32.totalorder 1, %s22
      %p389 = scmp.lt.s32.totalorder %s22, 3
      %p390 = pnand %p388, %p389
      %p391 = pneg %p390
      // Predicated region
      $region69: #{tpu_custom_call.1} parent=5 // pred_check
        _
      $region70: #{tpu_custom_call.1} parent=5 // pred_check_branch
        %393 = sbr.rel (%p390) target = $region72
      $region71: #{tpu_custom_call.1} parent=5 // pred_region
        %s394 = ssub.s32 %s22, 1
        %p395 = scmp.lt.s32.totalorder %s27, 1
        %s396 = scalar_select %p395, %s27, 1
        %s397 = smul.addr %s396, 8
        %s398 = scalar_lea.vmem %s0, %s397
        %p399 = pneg %p48
        %p400 = pneg %p45
        %p401 = pneg %p69
        %p402 = pneg %p66
        %p403 = pneg %p90
        %p404 = pneg %p87
        %p405 = pneg %p111
        %p406 = pneg %p108
        %p407 = pneg %p132
        %p408 = pneg %p129
        %p409 = pneg %p153
        %p410 = pneg %p150
        %p411 = pneg %p174
        %p412 = pneg %p171
        %p413 = pneg %p195
        %p414 = pneg %p192
        %p415 = pneg %p216
        %p416 = pneg %p213
        %p417 = pneg %p237
        %p418 = pneg %p234
        %p419 = pneg %p258
        %p420 = pneg %p255
        %p421 = pneg %p279
        %p422 = pneg %p276
        %p423 = pneg %p300
        %p424 = pneg %p297
        %p425 = pneg %p326
        %p426 = pneg %p323
        %s427 = sand.u32 %s313, 1
        %s428 = scalar_lea.sflag [#allocation3], %s427
        %s429 = sand.u32 %s313, 1
        %s430 = smul.addr %s429, 8
        %s431 = scalar_lea.vmem [#allocation2], %s430
        %p432 = scmp.lt.s32.totalorder %s27, 1
        %s433 = scalar_select %p432, %s27, 1
        %s434 = smul.addr %s433, 8
        %s435 = scalar_lea.vmem %s0, %s434
        %v437 = vld [vmem:[%s435] sm:$0xff]
        %vm438 = vcmask 261120
        %v439 = vsel %vm438, %v437, 0.0
        %440 = vadd.xlane.f32.xlu0 %v439
        %v441 = vpop.xlane.xlu0 %440
        %v442 = vrcp.pop 32.0
        %v443 = vmul.f32 32.0, %v442
        %v444 = vsub.f32 1.0, %v443
        %v445 = vmul.f32 %v442, %v444
        %v446 = vadd.f32 %v442, %v445
        %vm447 = vweird.f32 %v442
        %v448 = vsel %vm447, %v442, %v446
        %v449 = vmul.f32 %v441, %v448
        %v450 = vsub.f32 %v437, %v449
        %v451 = vmul.f32 %v450, %v450
        %v452 = vsel %vm438, %v451, 0.0
        %453 = vadd.xlane.f32.xlu0 %v452
        %v454 = vpop.xlane.xlu0 %453
        %v455 = vmul.f32 %v454, %v448
        %v456 = vadd.f32 %v455, 1e-05
        %v457 = vrsqrt.pop %v456
        %v458 = vmul.f32 %v457, %v456
        %v459 = vmul.f32 %v458, %v457
        %v460 = vmul.f32 0.5, %v459
        %v461 = vsub.f32 1.5, %v460
        %v462 = vmul.f32 %v457, %v461
        %vm463 = vweird.f32 %v456
        %vm464 = vweird.f32 %v457
        %vm465 = vmor %vm463, %vm464
        %v466 = vsel %vm465, %v457, %v462
        %v467 = vmul.f32 %v450, %v466
        %v468 = vld [vmem:[%s1] sm:$0x1]
        %v470 = vperm.slane %v468, 0
        %v472 = vmul.f32 %v467, %v470
        %v473 = vld [vmem:[%s2] sm:$0x1]
        %v475 = vperm.slane %v473, 0
        %v477 = vadd.f32 %v472, %v475
        %v478 = vpack.c.bf16 %v477, %v477
        %v479 = vld [vmem:[%s3] sm:$0xf]
        %v480 = vld [vmem:[%s3 + $0x4] sm:$0xf]
        %v481 = vld [vmem:[%s3 + $0x8] sm:$0xf]
        %v482 = vld [vmem:[%s3 + $0xc] sm:$0xf]
        %v487 = vunpack.c.l.b16 %v479
        %v488 = vunpack.c.l.b16 %v480
        %v489 = vunpack.c.l.b16 %v481
        %v490 = vunpack.c.l.b16 %v482
        %v491 = vpack.c.b16 %v488, %v487
        %v492 = vpack.c.b16 %v490, %v489
        %v496 = vsel %vm438, %v478, 0
        %498 = vmatpush.bf16.msra.mxu0 0
        %499 = vmatpush.bf16.msra.mxu0 0
        %500 = vmatpush.bf16.msra.mxu0 0
        %501 = vmatpush.bf16.msra.mxu0 0
        %502 = vmatpush.bf16.msra.mxu0 0
        %503 = vmatpush.bf16.msra.mxu0 0
        %504 = vmatpush.bf16.msra.mxu0 %v492
        %505 = vmatpush.bf16.msra.mxu0 %v491
        %506 = vmatmul.bf16.gmra.mxu0 %v496
        %v507 = vpop.f32.mrf.mxu0
        %v508 = vadd.f32 0.0, %v507
        %v509 = vpop.f32.mrf.mxu0
        %510 = vdwg.mxu0
        %512 = vrot.lane.b32.xlu0 %v508, 120
        %v513 = vpop.permute.xlu0 %512
        %515 = vrot.lane.b32.xlu0 %v508, 112
        %v516 = vpop.permute.xlu0 %515
        %518 = vrot.lane.b32.xlu0 %v508, 104
        %v519 = vpop.permute.xlu0 %518
        %v521 = vrot.slane %v516, 4
        %vm522 = vcmask 1047556
        %v523 = vsel %vm522, %v521, %v508
        %v524 = vrot.slane %v508, 4
        %v525 = vsel %vm522, %v516, %v524
        %v527 = vunpack.c.l.s4 1983009808
        %v528 = vunpack.c.0.s8 %v527
        %v529 = vperm.slane %v523, %v528
        %v531 = vunpack.c.l.s4 1983009808
        %v532 = vunpack.c.0.s8 %v531
        %v533 = vperm.slane %v525, %v532
        %v534 = vrot.slane %v519, 4
        %v535 = vsel %vm522, %v534, %v513
        %v536 = vrot.slane %v513, 4
        %v537 = vsel %vm522, %v519, %v536
        %v539 = vunpack.c.l.s4 1983009808
        %v540 = vunpack.c.0.s8 %v539
        %v541 = vperm.slane %v535, %v540
        %v543 = vunpack.c.l.s4 1983009808
        %v544 = vunpack.c.0.s8 %v543
        %v545 = vperm.slane %v537, %v544
        %v546 = vrot.slane %v541, 4
        %v547 = vsel %vm522, %v546, %v529
        %v548 = vrot.slane %v529, 4
        %v549 = vsel %vm522, %v541, %v548
        %v551 = vunpack.c.l.s4 1934713408
        %v552 = vunpack.c.0.s8 %v551
        %v553 = vperm.slane %v547, %v552
        %v555 = vunpack.c.l.s4 1934713408
        %v556 = vunpack.c.0.s8 %v555
        %v557 = vperm.slane %v549, %v556
        %v558 = vrot.slane %v545, 4
        %v559 = vsel %vm522, %v558, %v533
        %v560 = vrot.slane %v533, 4
        %v561 = vsel %vm522, %v545, %v560
        %v563 = vunpack.c.l.s4 1934713408
        %v564 = vunpack.c.0.s8 %v563
        %v565 = vperm.slane %v559, %v564
        %v567 = vunpack.c.l.s4 1934713408
        %v568 = vunpack.c.0.s8 %v567
        %v569 = vperm.slane %v561, %v568
        %v570 = vrot.slane %v553, 4
        %v571 = vsel %vm522, 0.0, %v570
        %v572 = vrot.slane %v557, 4
        %v573 = vsel %vm522, 0.0, %v572
        %v574 = vrot.slane %v565, 4
        %v575 = vsel %vm522, 0.0, %v574
        %v576 = vrot.slane %v569, 4
        %v577 = vsel %vm522, 0.0, %v576
        %v578 = vsel %vm522, %v572, %v553
        %v580 = vunpack.c.l.s4 1983009808
        %v581 = vunpack.c.0.s8 %v580
        %v582 = vperm.slane %v578, %v581
        %v583 = vrot.slane %v573, 4
        %v584 = vsel %vm522, %v583, %v571
        %v586 = vunpack.c.l.s4 1983009808
        %v587 = vunpack.c.0.s8 %v586
        %v588 = vperm.slane %v584, %v587
        %v589 = vsel %vm522, %v576, %v565
        %v591 = vunpack.c.l.s4 1983009808
        %v592 = vunpack.c.0.s8 %v591
        %v593 = vperm.slane %v589, %v592
        %v594 = vrot.slane %v577, 4
        %v595 = vsel %vm522, %v594, %v575
        %v597 = vunpack.c.l.s4 1983009808
        %v598 = vunpack.c.0.s8 %v597
        %v599 = vperm.slane %v595, %v598
        %v600 = vrot.slane %v588, 4
        %v601 = vsel %vm522, %v600, %v582
        %v602 = vrot.slane %v582, 4
        %v603 = vsel %vm522, %v588, %v602
        %v605 = vunpack.c.l.s4 1934713408
        %v606 = vunpack.c.0.s8 %v605
        %v607 = vperm.slane %v601, %v606
        %v609 = vunpack.c.l.s4 1934713408
        %v610 = vunpack.c.0.s8 %v609
        %v611 = vperm.slane %v603, %v610
        %v612 = vrot.slane %v599, 4
        %v613 = vsel %vm522, %v612, %v593
        %v614 = vrot.slane %v593, 4
        %v615 = vsel %vm522, %v599, %v614
        %v617 = vunpack.c.l.s4 1934713408
        %v618 = vunpack.c.0.s8 %v617
        %v619 = vperm.slane %v613, %v618
        %v621 = vunpack.c.l.s4 1934713408
        %v622 = vunpack.c.0.s8 %v621
        %v623 = vperm.slane %v615, %v622
        %v624 = vrot.slane %v619, 4
        %v625 = vsel %vm522, %v624, %v607
        %v626 = vrot.slane %v607, 4
        %v627 = vsel %vm522, %v619, %v626
        %v628 = vrot.slane %v623, 4
        %v629 = vsel %vm522, %v628, %v611
        %v630 = vrot.slane %v611, 4
        %v631 = vsel %vm522, %v623, %v630
        %632 = vrot.lane.b32.xlu0 %v508, 96
        %v633 = vpop.permute.xlu0 %632
        %634 = vrot.lane.b32.xlu0 %v513, 96
        %v635 = vpop.permute.xlu0 %634
        %636 = vrot.lane.b32.xlu0 %v516, 96
        %v637 = vpop.permute.xlu0 %636
        %638 = vrot.lane.b32.xlu0 %v519, 96
        %v639 = vpop.permute.xlu0 %638
        %v644 = vrot.slane %v637, 4
        %v645 = vsel %vm522, %v644, %v633
        %v646 = vrot.slane %v633, 4
        %v647 = vsel %vm522, %v637, %v646
        %v649 = vunpack.c.l.s4 1983009808
        %v650 = vunpack.c.0.s8 %v649
        %v651 = vperm.slane %v645, %v650
        %v653 = vunpack.c.l.s4 1983009808
        %v654 = vunpack.c.0.s8 %v653
        %v655 = vperm.slane %v647, %v654
        %v656 = vrot.slane %v639, 4
        %v657 = vsel %vm522, %v656, %v635
        %v658 = vrot.slane %v635, 4
        %v659 = vsel %vm522, %v639, %v658
        %v661 = vunpack.c.l.s4 1983009808
        %v662 = vunpack.c.0.s8 %v661
        %v663 = vperm.slane %v657, %v662
        %v665 = vunpack.c.l.s4 1983009808
        %v666 = vunpack.c.0.s8 %v665
        %v667 = vperm.slane %v659, %v666
        %v668 = vrot.slane %v663, 4
        %v669 = vsel %vm522, %v668, %v651
        %v670 = vrot.slane %v651, 4
        %v671 = vsel %vm522, %v663, %v670
        %v673 = vunpack.c.l.s4 1934713408
        %v674 = vunpack.c.0.s8 %v673
        %v675 = vperm.slane %v669, %v674
        %v677 = vunpack.c.l.s4 1934713408
        %v678 = vunpack.c.0.s8 %v677
        %v679 = vperm.slane %v671, %v678
        %v680 = vrot.slane %v667, 4
        %v681 = vsel %vm522, %v680, %v655
        %v682 = vrot.slane %v655, 4
        %v683 = vsel %vm522, %v667, %v682
        %v685 = vunpack.c.l.s4 1934713408
        %v686 = vunpack.c.0.s8 %v685
        %v687 = vperm.slane %v681, %v686
        %v689 = vunpack.c.l.s4 1934713408
        %v690 = vunpack.c.0.s8 %v689
        %v691 = vperm.slane %v683, %v690
        %v692 = vrot.slane %v675, 4
        %v693 = vsel %vm522, 0.0, %v692
        %v694 = vrot.slane %v679, 4
        %v695 = vsel %vm522, 0.0, %v694
        %v696 = vrot.slane %v687, 4
        %v697 = vsel %vm522, 0.0, %v696
        %v698 = vrot.slane %v691, 4
        %v699 = vsel %vm522, 0.0, %v698
        %v700 = vsel %vm522, %v694, %v675
        %v702 = vunpack.c.l.s4 1983009808
        %v703 = vunpack.c.0.s8 %v702
        %v704 = vperm.slane %v700, %v703
        %v705 = vrot.slane %v695, 4
        %v706 = vsel %vm522, %v705, %v693
        %v708 = vunpack.c.l.s4 1983009808
        %v709 = vunpack.c.0.s8 %v708
        %v710 = vperm.slane %v706, %v709
        %v711 = vsel %vm522, %v698, %v687
        %v713 = vunpack.c.l.s4 1983009808
        %v714 = vunpack.c.0.s8 %v713
        %v715 = vperm.slane %v711, %v714
        %v716 = vrot.slane %v699, 4
        %v717 = vsel %vm522, %v716, %v697
        %v719 = vunpack.c.l.s4 1983009808
        %v720 = vunpack.c.0.s8 %v719
        %v721 = vperm.slane %v717, %v720
        %v722 = vrot.slane %v710, 4
        %v723 = vsel %vm522, %v722, %v704
        %v724 = vrot.slane %v704, 4
        %v725 = vsel %vm522, %v710, %v724
        %v727 = vunpack.c.l.s4 1934713408
        %v728 = vunpack.c.0.s8 %v727
        %v729 = vperm.slane %v723, %v728
        %v731 = vunpack.c.l.s4 1934713408
        %v732 = vunpack.c.0.s8 %v731
        %v733 = vperm.slane %v725, %v732
        %v734 = vrot.slane %v721, 4
        %v735 = vsel %vm522, %v734, %v715
        %v736 = vrot.slane %v715, 4
        %v737 = vsel %vm522, %v721, %v736
        %v739 = vunpack.c.l.s4 1934713408
        %v740 = vunpack.c.0.s8 %v739
        %v741 = vperm.slane %v735, %v740
        %v743 = vunpack.c.l.s4 1934713408
        %v744 = vunpack.c.0.s8 %v743
        %v745 = vperm.slane %v737, %v744
        %v746 = vrot.slane %v741, 4
        %v747 = vsel %vm522, %v746, %v729
        %v748 = vrot.slane %v729, 4
        %v749 = vsel %vm522, %v741, %v748
        %v750 = vrot.slane %v745, 4
        %v751 = vsel %vm522, %v750, %v733
        %v752 = vrot.slane %v733, 4
        %v753 = vsel %vm522, %v745, %v752
        %754 = vrot.lane.b32.xlu0 %v508, 64
        %v755 = vpop.permute.xlu0 %754
        %756 = vrot.lane.b32.xlu0 %v513, 64
        %v757 = vpop.permute.xlu0 %756
        %758 = vrot.lane.b32.xlu0 %v516, 64
        %v759 = vpop.permute.xlu0 %758
        %760 = vrot.lane.b32.xlu0 %v519, 64
        %v761 = vpop.permute.xlu0 %760
        %v766 = vrot.slane %v759, 4
        %v767 = vsel %vm522, %v766, %v755
        %v768 = vrot.slane %v755, 4
        %v769 = vsel %vm522, %v759, %v768
        %v771 = vunpack.c.l.s4 1983009808
        %v772 = vunpack.c.0.s8 %v771
        %v773 = vperm.slane %v767, %v772
        %v775 = vunpack.c.l.s4 1983009808
        %v776 = vunpack.c.0.s8 %v775
        %v777 = vperm.slane %v769, %v776
        %v778 = vrot.slane %v761, 4
        %v779 = vsel %vm522, %v778, %v757
        %v780 = vrot.slane %v757, 4
        %v781 = vsel %vm522, %v761, %v780
        %v783 = vunpack.c.l.s4 1983009808
        %v784 = vunpack.c.0.s8 %v783
        %v785 = vperm.slane %v779, %v784
        %v787 = vunpack.c.l.s4 1983009808
        %v788 = vunpack.c.0.s8 %v787
        %v789 = vperm.slane %v781, %v788
        %v790 = vrot.slane %v785, 4
        %v791 = vsel %vm522, %v790, %v773
        %v792 = vrot.slane %v773, 4
        %v793 = vsel %vm522, %v785, %v792
        %v795 = vunpack.c.l.s4 1934713408
        %v796 = vunpack.c.0.s8 %v795
        %v797 = vperm.slane %v791, %v796
        %v799 = vunpack.c.l.s4 1934713408
        %v800 = vunpack.c.0.s8 %v799
        %v801 = vperm.slane %v793, %v800
        %v802 = vrot.slane %v789, 4
        %v803 = vsel %vm522, %v802, %v777
        %v804 = vrot.slane %v777, 4
        %v805 = vsel %vm522, %v789, %v804
        %v807 = vunpack.c.l.s4 1934713408
        %v808 = vunpack.c.0.s8 %v807
        %v809 = vperm.slane %v803, %v808
        %v811 = vunpack.c.l.s4 1934713408
        %v812 = vunpack.c.0.s8 %v811
        %v813 = vperm.slane %v805, %v812
        %v814 = vrot.slane %v797, 4
        %v815 = vsel %vm522, 0.0, %v814
        %v816 = vrot.slane %v801, 4
        %v817 = vsel %vm522, 0.0, %v816
        %v818 = vrot.slane %v809, 4
        %v819 = vsel %vm522, 0.0, %v818
        %v820 = vrot.slane %v813, 4
        %v821 = vsel %vm522, 0.0, %v820
        %v822 = vsel %vm522, %v816, %v797
        %v824 = vunpack.c.l.s4 1983009808
        %v825 = vunpack.c.0.s8 %v824
        %v826 = vperm.slane %v822, %v825
        %v827 = vrot.slane %v817, 4
        %v828 = vsel %vm522, %v827, %v815
        %v830 = vunpack.c.l.s4 1983009808
        %v831 = vunpack.c.0.s8 %v830
        %v832 = vperm.slane %v828, %v831
        %v833 = vsel %vm522, %v820, %v809
        %v835 = vunpack.c.l.s4 1983009808
        %v836 = vunpack.c.0.s8 %v835
        %v837 = vperm.slane %v833, %v836
        %v838 = vrot.slane %v821, 4
        %v839 = vsel %vm522, %v838, %v819
        %v841 = vunpack.c.l.s4 1983009808
        %v842 = vunpack.c.0.s8 %v841
        %v843 = vperm.slane %v839, %v842
        %v844 = vrot.slane %v832, 4
        %v845 = vsel %vm522, %v844, %v826
        %v846 = vrot.slane %v826, 4
        %v847 = vsel %vm522, %v832, %v846
        %v849 = vunpack.c.l.s4 1934713408
        %v850 = vunpack.c.0.s8 %v849
        %v851 = vperm.slane %v845, %v850
        %v853 = vunpack.c.l.s4 1934713408
        %v854 = vunpack.c.0.s8 %v853
        %v855 = vperm.slane %v847, %v854
        %v856 = vrot.slane %v843, 4
        %v857 = vsel %vm522, %v856, %v837
        %v858 = vrot.slane %v837, 4
        %v859 = vsel %vm522, %v843, %v858
        %v861 = vunpack.c.l.s4 1934713408
        %v862 = vunpack.c.0.s8 %v861
        %v863 = vperm.slane %v857, %v862
        %v865 = vunpack.c.l.s4 1934713408
        %v866 = vunpack.c.0.s8 %v865
        %v867 = vperm.slane %v859, %v866
        %v868 = vrot.slane %v863, 4
        %v869 = vsel %vm522, %v868, %v851
        %v870 = vrot.slane %v851, 4
        %v871 = vsel %vm522, %v863, %v870
        %v872 = vrot.slane %v867, 4
        %v873 = vsel %vm522, %v872, %v855
        %v874 = vrot.slane %v855, 4
        %v875 = vsel %vm522, %v867, %v874
        %v876 = vpack.c.bf16 %v625, %v625
        %v877 = vpack.c.bf16 %v627, %v627
        %v878 = vpack.c.bf16 %v629, %v629
        %v879 = vpack.c.bf16 %v631, %v631
        %v880 = vpack.c.bf16 %v747, %v747
        %v881 = vpack.c.bf16 %v749, %v749
        %v882 = vpack.c.bf16 %v751, %v751
        %v883 = vpack.c.bf16 %v753, %v753
        %vm884 = vcmask 64512
        %v886 = vsel %vm884, %v876, 0
        %v889 = vsel %vm884, %v880, 0
        %891 = vmatpush.bf16.xpose.msra.mxu0 0
        %892 = vmatpush.bf16.xpose.msra.mxu0 0
        %893 = vmatpush.bf16.xpose.msra.mxu0 0
        %894 = vmatpush.bf16.xpose.msra.mxu0 0
        %895 = vmatpush.bf16.xpose.msra.mxu0 0
        %896 = vmatpush.bf16.xpose.msra.mxu0 0
        %897 = vmatpush.bf16.xpose.msra.mxu0 0
        %898 = vmatpush.bf16.xpose.msra.mxu0 %v889
        %899 = vmatmul.bf16.gmra.mxu0 %v886
        %v900 = vpop.f32.mrf.mxu0
        %v901 = vadd.f32 0.0, %v900
        %v902 = vpop.f32.mrf.mxu0
        %903 = vdwg.mxu0
        %v905 = vsel %vm884, %v877, 0
        %v908 = vsel %vm884, %v881, 0
        %910 = vmatpush.bf16.xpose.msra.mxu0 0
        %911 = vmatpush.bf16.xpose.msra.mxu0 0
        %912 = vmatpush.bf16.xpose.msra.mxu0 0
        %913 = vmatpush.bf16.xpose.msra.mxu0 0
        %914 = vmatpush.bf16.xpose.msra.mxu0 0
        %915 = vmatpush.bf16.xpose.msra.mxu0 0
        %916 = vmatpush.bf16.xpose.msra.mxu0 0
        %917 = vmatpush.bf16.xpose.msra.mxu0 %v908
        %918 = vmatmul.bf16.gmra.mxu0 %v905
        %v919 = vpop.f32.mrf.mxu0
        %v920 = vadd.f32 0.0, %v919
        %v921 = vpop.f32.mrf.mxu0
        %922 = vdwg.mxu0
        %v924 = vsel %vm884, %v878, 0
        %v927 = vsel %vm884, %v882, 0
        %929 = vmatpush.bf16.xpose.msra.mxu0 0
        %930 = vmatpush.bf16.xpose.msra.mxu0 0
        %931 = vmatpush.bf16.xpose.msra.mxu0 0
        %932 = vmatpush.bf16.xpose.msra.mxu0 0
        %933 = vmatpush.bf16.xpose.msra.mxu0 0
        %934 = vmatpush.bf16.xpose.msra.mxu0 0
        %935 = vmatpush.bf16.xpose.msra.mxu0 0
        %936 = vmatpush.bf16.xpose.msra.mxu0 %v927
        %937 = vmatmul.bf16.gmra.mxu0 %v924
        %v938 = vpop.f32.mrf.mxu0
        %v939 = vadd.f32 0.0, %v938
        %v940 = vpop.f32.mrf.mxu0
        %941 = vdwg.mxu0
        %v943 = vsel %vm884, %v879, 0
        %v946 = vsel %vm884, %v883, 0
        %948 = vmatpush.bf16.xpose.msra.mxu0 0
        %949 = vmatpush.bf16.xpose.msra.mxu0 0
        %950 = vmatpush.bf16.xpose.msra.mxu0 0
        %951 = vmatpush.bf16.xpose.msra.mxu0 0
        %952 = vmatpush.bf16.xpose.msra.mxu0 0
        %953 = vmatpush.bf16.xpose.msra.mxu0 0
        %954 = vmatpush.bf16.xpose.msra.mxu0 0
        %955 = vmatpush.bf16.xpose.msra.mxu0 %v946
        %956 = vmatmul.bf16.gmra.mxu0 %v943
        %v957 = vpop.f32.mrf.mxu0
        %v958 = vadd.f32 0.0, %v957
        %v959 = vpop.f32.mrf.mxu0
        %960 = vdwg.mxu0
        %v961 = vsel %vm884, %v901, -inf
        %962 = vmax.xlane.f32.xlu0 %v961
        %v963 = vpop.xlane.xlu0 %962
        %v964 = vsel %vm884, %v920, -inf
        %965 = vmax.xlane.f32.xlu0 %v964
        %v966 = vpop.xlane.xlu0 %965
        %v967 = vsel %vm884, %v939, -inf
        %968 = vmax.xlane.f32.xlu0 %v967
        %v969 = vpop.xlane.xlu0 %968
        %v970 = vsel %vm884, %v958, -inf
        %971 = vmax.xlane.f32.xlu0 %v970
        %v972 = vpop.xlane.xlu0 %971
        %v973 = vsub.f32 %v901, %v963
        %v974 = vsub.f32 %v920, %v966
        %v975 = vsub.f32 %v939, %v969
        %v976 = vsub.f32 %v958, %v972
        %v977 = vmul.f32 %v973, 1.442695
        %v978 = vpow.pop %v977
        %v979 = vmul.f32 %v974, 1.442695
        %v980 = vpow.pop %v979
        %v981 = vmul.f32 %v975, 1.442695
        %v982 = vpow.pop %v981
        %v983 = vmul.f32 %v976, 1.442695
        %v984 = vpow.pop %v983
        %v985 = vsel %vm884, %v978, 0.0
        %986 = vadd.xlane.f32.xlu0 %v985
        %v987 = vpop.xlane.xlu0 %986
        %v988 = vsel %vm884, %v980, 0.0
        %989 = vadd.xlane.f32.xlu0 %v988
        %v990 = vpop.xlane.xlu0 %989
        %v991 = vsel %vm884, %v982, 0.0
        %992 = vadd.xlane.f32.xlu0 %v991
        %v993 = vpop.xlane.xlu0 %992
        %v994 = vsel %vm884, %v984, 0.0
        %995 = vadd.xlane.f32.xlu0 %v994
        %v996 = vpop.xlane.xlu0 %995
        %v997 = vpack.c.bf16 %v978, %v978
        %v998 = vpack.c.bf16 %v980, %v980
        %v999 = vpack.c.bf16 %v982, %v982
        %v1000 = vpack.c.bf16 %v984, %v984
        %v1001 = vpack.c.bf16 %v869, %v869
        %v1002 = vpack.c.bf16 %v871, %v871
        %v1003 = vpack.c.bf16 %v873, %v873
        %v1004 = vpack.c.bf16 %v875, %v875
        %v1006 = vsel %vm884, %v997, 0
        %vm1008 = vcmask 1043456
        %v1010 = vsel %vm1008, %v1001, 0
        %1012 = vmatpush.bf16.msra.mxu0 0
        %1013 = vmatpush.bf16.msra.mxu0 0
        %1014 = vmatpush.bf16.msra.mxu0 0
        %1015 = vmatpush.bf16.msra.mxu0 0
        %1016 = vmatpush.bf16.msra.mxu0 0
        %1017 = vmatpush.bf16.msra.mxu0 0
        %1018 = vmatpush.bf16.msra.mxu0 0
        %1019 = vmatpush.bf16.msra.mxu0 %v1010
        %1020 = vmatmul.bf16.gmra.mxu0 %v1006
        %v1021 = vpop.f32.mrf.mxu0
        %v1022 = vadd.f32 0.0, %v1021
        %v1023 = vpop.f32.mrf.mxu0
        %1024 = vdwg.mxu0
        %v1026 = vsel %vm884, %v998, 0
        %v1029 = vsel %vm1008, %v1002, 0
        %1031 = vmatpush.bf16.msra.mxu0 0
        %1032 = vmatpush.bf16.msra.mxu0 0
        %1033 = vmatpush.bf16.msra.mxu0 0
        %1034 = vmatpush.bf16.msra.mxu0 0
        %1035 = vmatpush.bf16.msra.mxu0 0
        %1036 = vmatpush.bf16.msra.mxu0 0
        %1037 = vmatpush.bf16.msra.mxu0 0
        %1038 = vmatpush.bf16.msra.mxu0 %v1029
        %1039 = vmatmul.bf16.gmra.mxu0 %v1026
        %v1040 = vpop.f32.mrf.mxu0
        %v1041 = vadd.f32 0.0, %v1040
        %v1042 = vpop.f32.mrf.mxu0
        %1043 = vdwg.mxu0
        %v1045 = vsel %vm884, %v999, 0
        %v1048 = vsel %vm1008, %v1003, 0
        %1050 = vmatpush.bf16.msra.mxu0 0
        %1051 = vmatpush.bf16.msra.mxu0 0
        %1052 = vmatpush.bf16.msra.mxu0 0
        %1053 = vmatpush.bf16.msra.mxu0 0
        %1054 = vmatpush.bf16.msra.mxu0 0
        %1055 = vmatpush.bf16.msra.mxu0 0
        %1056 = vmatpush.bf16.msra.mxu0 0
        %1057 = vmatpush.bf16.msra.mxu0 %v1048
        %1058 = vmatmul.bf16.gmra.mxu0 %v1045
        %v1059 = vpop.f32.mrf.mxu0
        %v1060 = vadd.f32 0.0, %v1059
        %v1061 = vpop.f32.mrf.mxu0
        %1062 = vdwg.mxu0
        %v1064 = vsel %vm884, %v1000, 0
        %v1067 = vsel %vm1008, %v1004, 0
        %1069 = vmatpush.bf16.msra.mxu0 0
        %1070 = vmatpush.bf16.msra.mxu0 0
        %1071 = vmatpush.bf16.msra.mxu0 0
        %1072 = vmatpush.bf16.msra.mxu0 0
        %1073 = vmatpush.bf16.msra.mxu0 0
        %1074 = vmatpush.bf16.msra.mxu0 0
        %1075 = vmatpush.bf16.msra.mxu0 0
        %1076 = vmatpush.bf16.msra.mxu0 %v1067
        %1077 = vmatmul.bf16.gmra.mxu0 %v1064
        %v1078 = vpop.f32.mrf.mxu0
        %v1079 = vadd.f32 0.0, %v1078
        %v1080 = vpop.f32.mrf.mxu0
        %1081 = vdwg.mxu0
        %v1082 = vrcp.pop %v987
        %v1083 = vrcp.pop %v990
        %v1084 = vrcp.pop %v993
        %v1085 = vrcp.pop %v996
        %v1086 = vmul.f32 %v1022, %v1082
        %v1087 = vmul.f32 %v1041, %v1083
        %v1088 = vmul.f32 %v1060, %v1084
        %v1089 = vmul.f32 %v1079, %v1085
        %v1090 = vrot.slane %v1088, 4
        %v1091 = vsel %vm522, %v1090, %v1086
        %v1092 = vrot.slane %v1086, 4
        %v1093 = vsel %vm522, %v1088, %v1092
        %v1095 = vunpack.c.l.s4 1983009808
        %v1096 = vunpack.c.0.s8 %v1095
        %v1097 = vperm.slane %v1091, %v1096
        %v1099 = vunpack.c.l.s4 1983009808
        %v1100 = vunpack.c.0.s8 %v1099
        %v1101 = vperm.slane %v1093, %v1100
        %v1102 = vrot.slane %v1089, 4
        %v1103 = vsel %vm522, %v1102, %v1087
        %v1104 = vrot.slane %v1087, 4
        %v1105 = vsel %vm522, %v1089, %v1104
        %v1107 = vunpack.c.l.s4 1983009808
        %v1108 = vunpack.c.0.s8 %v1107
        %v1109 = vperm.slane %v1103, %v1108
        %v1111 = vunpack.c.l.s4 1983009808
        %v1112 = vunpack.c.0.s8 %v1111
        %v1113 = vperm.slane %v1105, %v1112
        %v1114 = vrot.slane %v1109, 4
        %v1115 = vsel %vm522, %v1114, %v1097
        %v1116 = vrot.slane %v1097, 4
        %v1117 = vsel %vm522, %v1109, %v1116
        %v1119 = vunpack.c.l.s4 1934713408
        %v1120 = vunpack.c.0.s8 %v1119
        %v1121 = vperm.slane %v1115, %v1120
        %v1123 = vunpack.c.l.s4 1934713408
        %v1124 = vunpack.c.0.s8 %v1123
        %v1125 = vperm.slane %v1117, %v1124
        %v1126 = vrot.slane %v1113, 4
        %v1127 = vsel %vm522, %v1126, %v1101
        %v1128 = vrot.slane %v1101, 4
        %v1129 = vsel %vm522, %v1113, %v1128
        %v1131 = vunpack.c.l.s4 1934713408
        %v1132 = vunpack.c.0.s8 %v1131
        %v1133 = vperm.slane %v1127, %v1132
        %v1135 = vunpack.c.l.s4 1934713408
        %v1136 = vunpack.c.0.s8 %v1135
        %v1137 = vperm.slane %v1129, %v1136
        %v1138 = vrot.slane %v1121, 4
        %v1139 = vsel %vm522, 0.0, %v1138
        %v1140 = vrot.slane %v1125, 4
        %v1141 = vsel %vm522, 0.0, %v1140
        %v1142 = vrot.slane %v1133, 4
        %v1143 = vsel %vm522, 0.0, %v1142
        %v1144 = vrot.slane %v1137, 4
        %v1145 = vsel %vm522, 0.0, %v1144
        %v1146 = vsel %vm522, %v1140, %v1121
        %v1148 = vunpack.c.l.s4 1983009808
        %v1149 = vunpack.c.0.s8 %v1148
        %v1150 = vperm.slane %v1146, %v1149
        %v1151 = vrot.slane %v1141, 4
        %v1152 = vsel %vm522, %v1151, %v1139
        %v1154 = vunpack.c.l.s4 1983009808
        %v1155 = vunpack.c.0.s8 %v1154
        %v1156 = vperm.slane %v1152, %v1155
        %v1157 = vsel %vm522, %v1144, %v1133
        %v1159 = vunpack.c.l.s4 1983009808
        %v1160 = vunpack.c.0.s8 %v1159
        %v1161 = vperm.slane %v1157, %v1160
        %v1162 = vrot.slane %v1145, 4
        %v1163 = vsel %vm522, %v1162, %v1143
        %v1165 = vunpack.c.l.s4 1983009808
        %v1166 = vunpack.c.0.s8 %v1165
        %v1167 = vperm.slane %v1163, %v1166
        %v1168 = vrot.slane %v1156, 4
        %v1169 = vsel %vm522, %v1168, %v1150
        %v1170 = vrot.slane %v1150, 4
        %v1171 = vsel %vm522, %v1156, %v1170
        %v1173 = vunpack.c.l.s4 1934713408
        %v1174 = vunpack.c.0.s8 %v1173
        %v1175 = vperm.slane %v1169, %v1174
        %v1177 = vunpack.c.l.s4 1934713408
        %v1178 = vunpack.c.0.s8 %v1177
        %v1179 = vperm.slane %v1171, %v1178
        %v1180 = vrot.slane %v1167, 4
        %v1181 = vsel %vm522, %v1180, %v1161
        %v1182 = vrot.slane %v1161, 4
        %v1183 = vsel %vm522, %v1167, %v1182
        %v1185 = vunpack.c.l.s4 1934713408
        %v1186 = vunpack.c.0.s8 %v1185
        %v1187 = vperm.slane %v1181, %v1186
        %v1189 = vunpack.c.l.s4 1934713408
        %v1190 = vunpack.c.0.s8 %v1189
        %v1191 = vperm.slane %v1183, %v1190
        %v1192 = vrot.slane %v1187, 4
        %v1193 = vsel %vm522, %v1192, %v1175
        %v1194 = vrot.slane %v1175, 4
        %v1195 = vsel %vm522, %v1187, %v1194
        %v1196 = vrot.slane %v1191, 4
        %v1197 = vsel %vm522, %v1196, %v1179
        %v1198 = vrot.slane %v1179, 4
        %v1199 = vsel %vm522, %v1191, %v1198
        %1201 = vrot.lane.b32.xlu0 %v1195, 8
        %v1202 = vpop.permute.xlu0 %1201
        %1205 = vrot.lane.b32.xlu0 %v1197, 16
        %v1206 = vpop.permute.xlu0 %1205
        %1209 = vrot.lane.b32.xlu0 %v1199, 24
        %v1210 = vpop.permute.xlu0 %1209
        %v1212 = vsel %vm884, %v1193, %v1202
        %vm1213 = vcmask 130048
        %v1214 = vsel %vm1213, %v1212, %v1206
        %vm1215 = vcmask 195584
        %v1216 = vsel %vm1215, %v1214, %v1210
        %v1217 = vpack.c.bf16 %v1216, %v1216
        %v1218 = vld [vmem:[%s5] sm:$0xf]
        %v1219 = vld [vmem:[%s5 + $0x4] sm:$0xf]
        %v1220 = vld [vmem:[%s5 + $0x8] sm:$0xf]
        %v1221 = vld [vmem:[%s5 + $0xc] sm:$0xf]
        %v1222 = vld [vmem:[%s6] sm:$0x1]
        %v1224 = vperm.slane %v1222, 0
        %v1230 = vunpack.c.l.b16 %v1218
        %v1231 = vunpack.c.l.b16 %v1219
        %v1232 = vunpack.c.l.b16 %v1220
        %v1233 = vunpack.c.l.b16 %v1221
        %v1234 = vpack.c.b16 %v1231, %v1230
        %v1235 = vpack.c.b16 %v1233, %v1232
        %v1239 = vsel %vm438, %v1217, 0
        %1241 = vmatpush.bf16.msra.mxu0 0
        %1242 = vmatpush.bf16.msra.mxu0 0
        %1243 = vmatpush.bf16.msra.mxu0 0
        %1244 = vmatpush.bf16.msra.mxu0 0
        %1245 = vmatpush.bf16.msra.mxu0 0
        %1246 = vmatpush.bf16.msra.mxu0 0
        %1247 = vmatpush.bf16.msra.mxu0 %v1235
        %1248 = vmatpush.bf16.msra.mxu0 %v1234
        %1249 = vmatmul.bf16.gmra.mxu0 %v1239
        %v1250 = vpop.f32.mrf.mxu0
        %v1251 = vadd.f32 %v1224, %v1250
        %v1252 = vpop.f32.mrf.mxu0
        %1253 = vdwg.mxu0
        %v1254 = vadd.f32 %v437, %v1251
        %v1255 = vsel %vm438, %v1254, 0.0
        %1256 = vadd.xlane.f32.xlu0 %v1255
        %v1257 = vpop.xlane.xlu0 %1256
        %v1258 = vmul.f32 %v1257, %v448
        %v1259 = vsub.f32 %v1254, %v1258
        %v1260 = vmul.f32 %v1259, %v1259
        %v1261 = vsel %vm438, %v1260, 0.0
        %1262 = vadd.xlane.f32.xlu0 %v1261
        %v1263 = vpop.xlane.xlu0 %1262
        %v1264 = vmul.f32 %v1263, %v448
        %v1265 = vadd.f32 %v1264, 1e-05
        %v1266 = vrsqrt.pop %v1265
        %v1267 = vmul.f32 %v1266, %v1265
        %v1268 = vmul.f32 %v1267, %v1266
        %v1269 = vmul.f32 0.5, %v1268
        %v1270 = vsub.f32 1.5, %v1269
        %v1271 = vmul.f32 %v1266, %v1270
        %vm1272 = vweird.f32 %v1265
        %vm1273 = vweird.f32 %v1266
        %vm1274 = vmor %vm1272, %vm1273
        %v1275 = vsel %vm1274, %v1266, %v1271
        %v1276 = vmul.f32 %v1259, %v1275
        %v1277 = vld [vmem:[%s7] sm:$0x1]
        %v1279 = vperm.slane %v1277, 0
        %v1281 = vmul.f32 %v1276, %v1279
        %v1282 = vld [vmem:[%s8] sm:$0x1]
        %v1284 = vperm.slane %v1282, 0
        %v1286 = vadd.f32 %v1281, %v1284
        %v1287 = vpack.c.bf16 %v1286, %v1286
        %v1288 = vld [vmem:[%s9] sm:$0xf]
        %v1289 = vld [vmem:[%s9 + $0x4] sm:$0xf]
        %v1290 = vld [vmem:[%s9 + $0x8] sm:$0xf]
        %v1291 = vld [vmem:[%s9 + $0xc] sm:$0xf]
        %v1292 = vld [vmem:[%s10] sm:$0x1]
        %v1294 = vperm.slane %v1292, 0
        %v1300 = vunpack.c.l.b16 %v1288
        %v1301 = vunpack.c.l.b16 %v1289
        %v1302 = vunpack.c.l.b16 %v1290
        %v1303 = vunpack.c.l.b16 %v1291
        %v1304 = vpack.c.b16 %v1301, %v1300
        %v1305 = vpack.c.b16 %v1303, %v1302
        %v1309 = vsel %vm438, %v1287, 0
        %1311 = vmatpush.bf16.msra.mxu0 0
        %1312 = vmatpush.bf16.msra.mxu0 0
        %1313 = vmatpush.bf16.msra.mxu0 0
        %1314 = vmatpush.bf16.msra.mxu0 0
        %1315 = vmatpush.bf16.msra.mxu0 0
        %1316 = vmatpush.bf16.msra.mxu0 0
        %1317 = vmatpush.bf16.msra.mxu0 %v1305
        %1318 = vmatpush.bf16.msra.mxu0 %v1304
        %1319 = vmatmul.bf16.gmra.mxu0 %v1309
        %v1320 = vpop.f32.mrf.mxu0
        %v1321 = vadd.f32 %v1294, %v1320
        %v1322 = vpop.f32.mrf.mxu0
        %1323 = vdwg.mxu0
        %v1324 = vmul.f32 %v1321, %v1321
        %v1325 = vmul.f32 %v1321, %v1324
        %v1326 = vmul.f32 %v1325, 0.044715
        %v1327 = vadd.f32 %v1321, %v1326
        %v1328 = vmul.f32 %v1327, 0.7978846
        %v1329 = vtanh.pop %v1328
        %v1330 = vadd.f32 %v1329, 1.0
        %v1331 = vmul.f32 %v1330, 0.5
        %v1332 = vmul.f32 %v1321, %v1331
        %v1333 = vpack.c.bf16 %v1332, %v1332
        %v1334 = vld [vmem:[%s11] sm:$0xf]
        %v1335 = vld [vmem:[%s11 + $0x4] sm:$0xf]
        %v1336 = vld [vmem:[%s11 + $0x8] sm:$0xf]
        %v1337 = vld [vmem:[%s11 + $0xc] sm:$0xf]
        %v1338 = vld [vmem:[%s11 + $0x10] sm:$0xf]
        %v1339 = vld [vmem:[%s11 + $0x14] sm:$0xf]
        %v1340 = vld [vmem:[%s11 + $0x18] sm:$0xf]
        %v1341 = vld [vmem:[%s11 + $0x1c] sm:$0xf]
        %v1342 = vld [vmem:[%s11 + $0x20] sm:$0xf]
        %v1343 = vld [vmem:[%s11 + $0x24] sm:$0xf]
        %v1344 = vld [vmem:[%s11 + $0x28] sm:$0xf]
        %v1345 = vld [vmem:[%s11 + $0x2c] sm:$0xf]
        %v1346 = vld [vmem:[%s11 + $0x30] sm:$0xf]
        %v1347 = vld [vmem:[%s11 + $0x34] sm:$0xf]
        %v1348 = vld [vmem:[%s11 + $0x38] sm:$0xf]
        %v1349 = vld [vmem:[%s11 + $0x3c] sm:$0xf]
        %v1350 = vld [vmem:[%s12] sm:$0x1]
        %v1352 = vperm.slane %v1350, 0
        %v1370 = vunpack.c.l.b16 %v1334
        %v1371 = vunpack.c.l.b16 %v1335
        %v1372 = vunpack.c.l.b16 %v1336
        %v1373 = vunpack.c.l.b16 %v1337
        %v1374 = vunpack.c.l.b16 %v1338
        %v1375 = vunpack.c.l.b16 %v1339
        %v1376 = vunpack.c.l.b16 %v1340
        %v1377 = vunpack.c.l.b16 %v1341
        %v1378 = vunpack.c.l.b16 %v1342
        %v1379 = vunpack.c.l.b16 %v1343
        %v1380 = vunpack.c.l.b16 %v1344
        %v1381 = vunpack.c.l.b16 %v1345
        %v1382 = vunpack.c.l.b16 %v1346
        %v1383 = vunpack.c.l.b16 %v1347
        %v1384 = vunpack.c.l.b16 %v1348
        %v1385 = vunpack.c.l.b16 %v1349
        %v1386 = vpack.c.b16 %v1371, %v1370
        %v1387 = vpack.c.b16 %v1373, %v1372
        %v1388 = vpack.c.b16 %v1375, %v1374
        %v1389 = vpack.c.b16 %v1377, %v1376
        %v1390 = vpack.c.b16 %v1379, %v1378
        %v1391 = vpack.c.b16 %v1381, %v1380
        %v1392 = vpack.c.b16 %v1383, %v1382
        %v1393 = vpack.c.b16 %v1385, %v1384
        %1402 = vmatpush.bf16.msra.mxu0 %v1393
        %1403 = vmatpush.bf16.msra.mxu0 %v1392
        %1404 = vmatpush.bf16.msra.mxu0 %v1391
        %1405 = vmatpush.bf16.msra.mxu0 %v1390
        %1406 = vmatpush.bf16.msra.mxu0 %v1389
        %1407 = vmatpush.bf16.msra.mxu0 %v1388
        %1408 = vmatpush.bf16.msra.mxu0 %v1387
        %1409 = vmatpush.bf16.msra.mxu0 %v1386
        %1410 = vmatmul.bf16.gmra.mxu0 %v1333
        %v1411 = vpop.f32.mrf.mxu0
        %v1412 = vadd.f32 %v1352, %v1411
        %v1413 = vpop.f32.mrf.mxu0
        %1414 = vdwg.mxu0
        %v1415 = vadd.f32 %v1254, %v1412
        %1416 = vst.msk [vmem:[%s431] sm:$0xff] %vm438, %v1415
        %s1417 = sand.u32 %s313, 1
        %s1418 = scalar_lea.sflag [#allocation3], %s1417
        %s1419 = sand.u32 %s313, 1
        %s1420 = smul.addr %s1419, 8
        %s1421 = scalar_lea.vmem [#allocation2], %s1420
        // Predicated region
        $region73: #{tpu_custom_call.1} parent=71 // pred_check
          %p1422 = pneg %p323
        $region74: #{tpu_custom_call.1} parent=71 // pred_check_branch
          %1424 = sbr.rel (%p1422) target = $region76
        $region75: #{tpu_custom_call.1} parent=71 // pred_region
          %1426 = vsyncadd %s1418, 0
          %s1427 = smul.addr %s27, 8
          %s1428 = scalar_lea.hbm %s13, %s1427
          %s1430 = sshll.u32 %s1421, 4
          %s1431 = int_to_ptr.vmem [resolvable:$true] %s1430
          %s1432 = sshll.u32 %s1428, 4
          %s1433 = int_to_ptr.hbm [resolvable:$true] %s1432
          %1435 = dma.vmem_to_hbm [thread:$0]  %s1431, 128, %s1433, %s1418
        $region76: #{tpu_custom_call.1} parent=71 // pred_fallthru
          _
      $region72: #{tpu_custom_call.1} parent=5 // pred_fallthru
        _
      %p1436 = scmp.le.s32.totalorder 2, %s22
      // Predicated region
      $region77: #{tpu_custom_call.1} parent=5 // pred_check
        %p1437 = pneg %p1436
      $region78: #{tpu_custom_call.1} parent=5 // pred_check_branch
        %1439 = sbr.rel (%p1437) target = $region80
      $region79: #{tpu_custom_call.1} parent=5 // pred_region
        %s1440 = ssub.s32 %s22, 2
        // Predicated region
        $region81: #{tpu_custom_call.1} parent=79 // pred_check
          %p1441 = pneg %p329
        $region82: #{tpu_custom_call.1} parent=79 // pred_check_branch
          %1443 = sbr.rel (%p1441) target = $region84
        $region83: #{tpu_custom_call.1} parent=79 // pred_region
          %s1444 = sand.u32 %s314, 1
          %s1445 = scalar_lea.sflag [#allocation3], %s1444
          %s1446 = sand.u32 %s314, 1
          %s1447 = smul.addr %s1446, 8
          %s1448 = scalar_lea.vmem [#allocation2], %s1447
          %1450 = dma.done %s1445, 128
        $region84: #{tpu_custom_call.1} parent=79 // pred_fallthru
          _
      $region80: #{tpu_custom_call.1} parent=5 // pred_fallthru
        _
    $region6: #{tpu_custom_call.1} parent=1 // loop_footer
      %s26 = sadd.s32 1, %s22
    $region7: #{tpu_custom_call.1} parent=1 // loop_footer_branch
      %21 = sbr.rel target = $region3
    $region8: #{tpu_custom_call.1} parent=1 // loop_exit
      _
    %1451 = vsyncpa [#allocation3], 1
    %s1452 = scalar_lea.sflag [#allocation3], 1
    %1453 = vsyncpa %s1452, 1

</llo_original>
